<compile_context>
chip_gen: v5e
topology: v5e:2x2
jax: 0.10.0
libtpu: 0.0.40
codegen_flags: <defaults>
</compile_context>

<pallas_src>
import math
from functools import partial

import jax
import jax.numpy as jnp
from jax.experimental import pallas as pl
from jax.experimental.pallas import tpu as pltpu

EPS = 1e-5  # PyTorch LayerNorm default


def _layernorm(v, gamma, beta):
    # Centered variance (robust) — the subtraction is needed for the output anyway.
    mu = jnp.mean(v, axis=-1, keepdims=True)
    d = v - mu
    var = jnp.mean(d * d, axis=-1, keepdims=True)
    return d * jax.lax.rsqrt(var + EPS) * gamma + beta


def _softmax_lastdim(s):
    s = s - jnp.max(s, axis=-1, keepdims=True)
    p = jnp.exp(s)
    # reciprocal on the EUP (otherwise idle) instead of a VPU divide.
    return p * pl.reciprocal(jnp.sum(p, axis=-1, keepdims=True), approx=True)


# ----------------------------------------------------------------------------
# Fused EncoderLayer kernel: one grid step == one var-block of one batch elem.
# ----------------------------------------------------------------------------
def _encoder_layer_kernel(
    x_ref, cross_ref,
    wq_s_ref, bq_s_ref, wk_s_ref, bk_s_ref, wv_s_ref, bv_s_ref, wo_s_ref, bo_s_ref,
    wq_c_ref, bq_c_ref, wk_c_ref, bk_c_ref, wv_c_ref, bv_c_ref, wo_c_ref, bo_c_ref,
    w1_ref, b1_ref, w2_ref, b2_ref,
    ln1_g_ref, ln1_b_ref, ln2_g_ref, ln2_b_ref, ln3_g_ref, ln3_b_ref,
    o_ref,
    *, vars_blk, seq_len, n_heads, activation):
    D = x_ref.shape[-1]
    Lc = cross_ref.shape[0]
    E = D // n_heads
    Lx = seq_len
    Vb = vars_blk
    Nb = Vb * Lx
    bf16 = jnp.bfloat16

    act = (lambda v: jnp.maximum(v, 0.0)) if activation == 'relu' else (
        lambda v: jax.nn.gelu(v, approximate=True))

    def proj(a_bf, w_ref, b_ref):
        # bf16 x bf16 matmul on the MXU, f32 accumulate, f32 bias add.
        return jnp.dot(a_bf, w_ref[...], preferred_element_type=jnp.float32) + b_ref[...]

    def split_heads(m):
        # (L, D) -> (n_heads, L, E): the head lane-slices are assembled ONCE
        # into a leading batch dim so attention is two big batched einsums
        # instead of a per-head loop of tiny dots + VALU accumulations.
        return jnp.stack([m[:, h * E:(h + 1) * E] for h in range(n_heads)], axis=0)

    xin = x_ref[...]                                   # (Nb, D) f32
    x_bf = xin.astype(bf16)

    # ------------- self-attention (softmax scale folded into Wq) ------------
    Q = proj(x_bf, wq_s_ref, bq_s_ref).astype(bf16)    # (Nb, D)
    K = proj(x_bf, wk_s_ref, bk_s_ref).astype(bf16)
    V = proj(x_bf, wv_s_ref, bv_s_ref).astype(bf16)
    G = n_heads * Vb                                   # combined (head, var) batch
    Qh = split_heads(Q).reshape(G, Lx, E)
    Kh = split_heads(K).reshape(G, Lx, E)
    Vh = split_heads(V).reshape(G, Lx, E)
    s = jnp.einsum('gqe,gke->gqk', Qh, Kh, preferred_element_type=jnp.float32)
    p = _softmax_lastdim(s).astype(bf16)
    ctx = jnp.einsum('gqk,gke->gqe', p, Vh, preferred_element_type=jnp.float32)
    # merge heads back (head-major columns, matching Wo's row order), then ONE
    # (Nb, D) @ (D, D) output-projection matmul.
    ctx_m = jnp.concatenate([ctx[h * Vb:(h + 1) * Vb] for h in range(n_heads)],
                            axis=-1).reshape(Nb, D).astype(bf16)
    attn = jnp.dot(ctx_m, wo_s_ref[...],
                   preferred_element_type=jnp.float32) + bo_s_ref[...]
    x1 = _layernorm(xin + attn, ln1_g_ref[...], ln1_b_ref[...])          # (Nb, D)

    # ------------- cross-attention on the Vb global tokens ------------------
    g = x1.reshape(Vb, Lx, D)[:, Lx - 1, :]                              # (Vb, D)
    cr_bf = cross_ref[...].astype(bf16)                                  # (Lc, D)
    Qg = proj(g.astype(bf16), wq_c_ref, bq_c_ref).astype(bf16)           # (Vb, D)
    Kc = proj(cr_bf, wk_c_ref, bk_c_ref).astype(bf16)                    # (Lc, D)
    Vc = proj(cr_bf, wv_c_ref, bv_c_ref).astype(bf16)
    sg = jnp.einsum('hve,hke->hvk', split_heads(Qg), split_heads(Kc),
                    preferred_element_type=jnp.float32)                  # (H, Vb, Lc)
    pg = _softmax_lastdim(sg).astype(bf16)
    cg = jnp.einsum('hvk,hke->hve', pg, split_heads(Vc),
                    preferred_element_type=jnp.float32)                  # (H, Vb, E)
    cg_m = jnp.concatenate([cg[h] for h in range(n_heads)],
                           axis=-1).astype(bf16)                         # (Vb, D)
    g_attn = jnp.dot(cg_m, wo_c_ref[...],
                     preferred_element_type=jnp.float32) + bo_c_ref[...]
    g_new = _layernorm(g + g_attn, ln2_g_ref[...], ln2_b_ref[...])       # (Vb, D)

    # ------ re-insert updated global tokens via select (no scratch stores) --
    pos = jax.lax.broadcasted_iota(jnp.int32, (Vb, Lx, 1), 1)
    xfull = jnp.where(pos == Lx - 1, g_new[:, None, :],
                      x1.reshape(Vb, Lx, D)).reshape(Nb, D)              # (Nb, D)

    # ------ FFN (conv1d k=1 -> act -> conv1d k=1) + residual + norm3 --------
    h1 = act(jnp.dot(xfull.astype(bf16), w1_ref[...],
                     preferred_element_type=jnp.float32) + b1_ref[...])  # (Nb, F)
    y = jnp.dot(h1.astype(bf16), w2_ref[...],
                preferred_element_type=jnp.float32) + b2_ref[...]
    o_ref[...] = _layernorm(xfull + y, ln3_g_ref[...], ln3_b_ref[...])


def _pick_vars_per_block(B, n_vars, Lx):
    # Largest var-block whose row count is sublane-aligned and <= 512, subject
    # to keeping >= 4 grid steps (>= 2 per v7x TensorCore for DMA pipelining).
    divisors = [d for d in range(n_vars, 0, -1) if n_vars % d == 0]
    aligned = [d for d in divisors if (d * Lx) % 8 == 0 and d * Lx <= 512]
    for d in aligned:
        if B * (n_vars // d) >= 4:
            return d
    return aligned[0] if aligned else n_vars


# ----------------------------------------------------------------------------
# Wrapper: flattens to 2-D row slabs, folds the softmax scale into Wq, casts
# weights to bf16, builds the (B, n_var_blocks) parallel grid.
# ----------------------------------------------------------------------------
def encoder_layer_forward(x, cross, params, n_heads, activation='relu',
                          vars_per_block=None):
    Bx, Lx, D = x.shape
    B, Lc, Dc = cross.shape
    assert Dc == D and Bx % B == 0
    n_vars = Bx // B
    E = D // n_heads
    assert n_heads * E == D
    F = params['ffn']['w1'].shape[1]
    scale = 1.0 / math.sqrt(E)
    bf16 = jnp.bfloat16

    sa, ca = params['self_attn'], params['cross_attn']
    # bf16 weights (MXU peak dtype, halves DMA/VMEM); 1/sqrt(E) folded into Wq/bq.
    wq_s = (sa['wq'] * scale).astype(bf16); bq_s = sa['bq'] * scale
    wk_s = sa['wk'].astype(bf16);           bk_s = sa['bk']
    wv_s = sa['wv'].astype(bf16);           bv_s = sa['bv']
    wo_s = sa['wo'].astype(bf16);           bo_s = sa['bo']
    wq_c = (ca['wq'] * scale).astype(bf16); bq_c = ca['bq'] * scale
    wk_c = ca['wk'].astype(bf16);           bk_c = ca['bk']
    wv_c = ca['wv'].astype(bf16);           bv_c = ca['bv']
    wo_c = ca['wo'].astype(bf16);           bo_c = ca['bo']
    w1 = params['ffn']['w1'].astype(bf16);  b1 = params['ffn']['b1']
    w2 = params['ffn']['w2'].astype(bf16);  b2 = params['ffn']['b2']

    if vars_per_block is None:
        vars_per_block = _pick_vars_per_block(B, n_vars, Lx)
    assert n_vars % vars_per_block == 0
    Vb = vars_per_block
    NVB = n_vars // Vb
    Nb = Vb * Lx
    # Row blocks must be sublane aligned (pad seq_len to a multiple of 8 for
    # odd sequence lengths before calling this wrapper).
    assert Nb % 8 == 0, 'var-block row count must be a multiple of 8'

    # Flatten to 2-D row slabs; rows are grouped batch-major over n_vars
    # (the TimeXer convention assumed by torch.reshape(x_glb_ori, (B,-1,D))).
    x2 = x.reshape(B * n_vars * Lx, D)
    cross2 = cross.reshape(B * Lc, D)

    weights = [wq_s, bq_s, wk_s, bk_s, wv_s, bv_s, wo_s, bo_s,
               wq_c, bq_c, wk_c, bk_c, wv_c, bv_c, wo_c, bo_c,
               w1, b1, w2, b2,
               params['norm1']['gamma'], params['norm1']['beta'],
               params['norm2']['gamma'], params['norm2']['beta'],
               params['norm3']['gamma'], params['norm3']['beta']]

    def fixed(shape):
        return pl.BlockSpec(shape, lambda b, v: (0, 0))

    x_spec = pl.BlockSpec((Nb, D), lambda b, v: (b * NVB + v, 0))
    cross_spec = pl.BlockSpec((Lc, D), lambda b, v: (b, 0))
    in_specs = [x_spec, cross_spec] + [fixed(w.shape) for w in weights]

    # Advisory cost estimate so XLA schedules the wrapper-side casts around us.
    Ntot = B * n_vars * Lx
    flops = (2 * Ntot * D * D * 4            # self-attn Q/K/V/O projections
             + 2 * Ntot * Lx * D * 2         # self-attn scores + context
             + 2 * B * n_vars * D * D * 2    # cross-attn Q and O projections
             + 2 * B * Lc * D * D * 2        # cross-attn K and V projections
             + 2 * B * n_vars * Lc * D * 2   # cross-attn scores + context
             + 2 * Ntot * D * F * 2)         # FFN conv1 + conv2
    transcendentals = Ntot * Lx + B * n_vars * Lc
    weight_bytes = sum(int(w.size) * w.dtype.itemsize for w in weights)
    bytes_accessed = (x2.size + cross2.size + Ntot * D) * 4 + weight_bytes
    cost = pl.CostEstimate(flops=int(flops), transcendentals=int(transcendentals),
                           bytes_accessed=int(bytes_accessed))

    # Explicit VMEM budget: double-buffered weights + activation blocks + FFN
    # hidden, clamped to v7x's 64 MiB physical VMEM.
    blk_bytes = (2 * Nb * D + Lc * D) * 4 + Nb * F * 4
    vmem_limit = 2 * weight_bytes + 4 * blk_bytes + (8 << 20)
    vmem_limit = int(max(16 << 20, min(vmem_limit, 64 << 20)))

    kernel = partial(_encoder_layer_kernel, vars_blk=Vb, seq_len=Lx,
                     n_heads=n_heads, activation=activation)

    out2 = pl.pallas_call(
        kernel,
        out_shape=jax.ShapeDtypeStruct((B * n_vars * Lx, D), jnp.float32),
        grid=(B, NVB),
        in_specs=in_specs,
        out_specs=x_spec,
        compiler_params=pltpu.CompilerParams(
            dimension_semantics=('parallel', 'parallel'),
            vmem_limit_bytes=vmem_limit),
        cost_estimate=cost,
    )(x2, cross2, *weights)

    return out2.reshape(Bx, Lx, D)


# ----------------------------------------------------------------------------
# Pure-JAX reference (f32) mirroring the PyTorch EncoderLayer forward.
# ----------------------------------------------------------------------------
def _reference_forward(x, cross, params, n_heads, activation='relu'):
    Bx, Lx, D = x.shape
    B, Lc, _ = cross.shape
    n_vars = Bx // B
    E = D // n_heads
    scale = 1.0 / math.sqrt(E)

    def ln(v, p):
        mu = v.mean(-1, keepdims=True)
        var = ((v - mu) ** 2).mean(-1, keepdims=True)
        return (v - mu) / jnp.sqrt(var + EPS) * p['gamma'] + p['beta']

    def mha(q, k, v, p):
        def split(t):
            return t.reshape(*t.shape[:-1], n_heads, E).swapaxes(-2, -3)
        Q = split(q @ p['wq'] + p['bq'])
        K = split(k @ p['wk'] + p['bk'])
        V = split(v @ p['wv'] + p['bv'])
        s = jnp.einsum('...qe,...ke->...qk', Q, K) * scale
        a = jax.nn.softmax(s, axis=-1)
        o = jnp.einsum('...qk,...ke->...qe', a, V)
        o = o.swapaxes(-2, -3).reshape(*q.shape)
        return o @ p['wo'] + p['bo']

    x1 = ln(x + mha(x, x, x, params['self_attn']), params['norm1'])
    g = x1[:, -1:, :]                                     # (Bx, 1, D)
    gq = g.reshape(B, n_vars, D)
    ga = mha(gq, cross, cross, params['cross_attn']).reshape(Bx, 1, D)
    g2 = ln(g + ga, params['norm2'])
    xf = jnp.concatenate([x1[:, :-1, :], g2], axis=1)
    h = xf @ params['ffn']['w1'] + params['ffn']['b1']
    h = jnp.maximum(h, 0.0) if activation == 'relu' else jax.nn.gelu(h)
    y = h @ params['ffn']['w2'] + params['ffn']['b2']
    return ln(xf + y, params['norm3'])


# ----------------------------------------------------------------------------
# Deterministic parameter init (synthetic; matches module shapes).
# NOTE: linear/conv1d(k=1) weights are stored as (in, out); real PyTorch
# weights ((out, in) / (out, in, 1)) would need a transpose when loading, and
# the scale folding into Wq/bq must be done after that transpose.
# ----------------------------------------------------------------------------
def init_params(key, d_model, d_ff, n_heads):
    ks = jax.random.split(key, 4)

    def w(k, shape):
        return (0.02 * jax.random.normal(k, shape)).astype(jnp.float32)

    def attn_params(k):
        kk = jax.random.split(k, 4)
        return {
            'wq': w(kk[0], (d_model, d_model)), 'bq': jnp.zeros((1, d_model), jnp.float32),
            'wk': w(kk[1], (d_model, d_model)), 'bk': jnp.zeros((1, d_model), jnp.float32),
            'wv': w(kk[2], (d_model, d_model)), 'bv': jnp.zeros((1, d_model), jnp.float32),
            'wo': w(kk[3], (d_model, d_model)), 'bo': jnp.zeros((1, d_model), jnp.float32),
        }

    def norm_params():
        return {'gamma': jnp.ones((1, d_model), jnp.float32),
                'beta': jnp.zeros((1, d_model), jnp.float32)}

    return {
        'self_attn': attn_params(ks[0]),
        'cross_attn': attn_params(ks[1]),
        'ffn': {
            'w1': w(ks[2], (d_model, d_ff)),
            'b1': jnp.zeros((1, d_ff), jnp.float32),
            'w2': w(ks[3], (d_ff, d_model)),
            'b2': jnp.zeros((1, d_model), jnp.float32),
        },
        'norm1': norm_params(),
        'norm2': norm_params(),
        'norm3': norm_params(),
    }


if __name__ == "__main__":
    B, n_vars, Lx, Lc = 2, 2, 8, 8
    d_model, n_heads = 32, 4
    d_ff = 4 * d_model

    key = jax.random.PRNGKey(0)
    kx, kc, kp = jax.random.split(key, 3)
    # x batches are B * n_vars (TimeXer flattens variables into the batch dim)
    x = jax.random.normal(kx, (B * n_vars, Lx, d_model), dtype=jnp.float32)
    cross = jax.random.normal(kc, (B, Lc, d_model), dtype=jnp.float32)
    params = init_params(kp, d_model, d_ff, n_heads)

    out = encoder_layer_forward(x, cross, params, n_heads)
    out = jax.block_until_ready(out)
    assert out.shape == (B * n_vars, Lx, d_model)
    assert bool(jnp.all(jnp.isfinite(out)))

    ref = _reference_forward(x, cross, params, n_heads)
    max_err = float(jnp.max(jnp.abs(out - ref)))
    assert max_err < 5e-2, f"mismatch vs reference: {max_err}"

    print("KERNEL_OK")
</pallas_src>

<mosaic_0001>
module attributes {stable_mosaic.version = 11 : i64} {
  func.func @_encoder_layer_kernel(%arg0: i32, %arg1: i32, %arg2: memref<8x32xf32, #tpu.memory_space<vmem>>, %arg3: memref<8x32xf32, #tpu.memory_space<vmem>>, %arg4: memref<32x32xbf16, #tpu.memory_space<vmem>>, %arg5: memref<1x32xf32, #tpu.memory_space<vmem>>, %arg6: memref<32x32xbf16, #tpu.memory_space<vmem>>, %arg7: memref<1x32xf32, #tpu.memory_space<vmem>>, %arg8: memref<32x32xbf16, #tpu.memory_space<vmem>>, %arg9: memref<1x32xf32, #tpu.memory_space<vmem>>, %arg10: memref<32x32xbf16, #tpu.memory_space<vmem>>, %arg11: memref<1x32xf32, #tpu.memory_space<vmem>>, %arg12: memref<32x32xbf16, #tpu.memory_space<vmem>>, %arg13: memref<1x32xf32, #tpu.memory_space<vmem>>, %arg14: memref<32x32xbf16, #tpu.memory_space<vmem>>, %arg15: memref<1x32xf32, #tpu.memory_space<vmem>>, %arg16: memref<32x32xbf16, #tpu.memory_space<vmem>>, %arg17: memref<1x32xf32, #tpu.memory_space<vmem>>, %arg18: memref<32x32xbf16, #tpu.memory_space<vmem>>, %arg19: memref<1x32xf32, #tpu.memory_space<vmem>>, %arg20: memref<32x128xbf16, #tpu.memory_space<vmem>>, %arg21: memref<1x128xf32, #tpu.memory_space<vmem>>, %arg22: memref<128x32xbf16, #tpu.memory_space<vmem>>, %arg23: memref<1x32xf32, #tpu.memory_space<vmem>>, %arg24: memref<1x32xf32, #tpu.memory_space<vmem>>, %arg25: memref<1x32xf32, #tpu.memory_space<vmem>>, %arg26: memref<1x32xf32, #tpu.memory_space<vmem>>, %arg27: memref<1x32xf32, #tpu.memory_space<vmem>>, %arg28: memref<1x32xf32, #tpu.memory_space<vmem>>, %arg29: memref<1x32xf32, #tpu.memory_space<vmem>>, %arg30: memref<8x32xf32, #tpu.memory_space<vmem>>) attributes {dimension_semantics = [#tpu.dimension_semantics<parallel>, #tpu.dimension_semantics<parallel>], iteration_bounds = array<i64: 2, 2>, scalar_prefetch = 0 : i64, scratch_operands = 0 : i64, tpu.core_type = #tpu.core_type<tc>, window_params = [{transform_indices = @transform_0, window_bounds = array<i64: 8, 32>}, {transform_indices = @transform_1, window_bounds = array<i64: 8, 32>}, {pipeline_mode = #tpu.pipeline_mode<synchronous>, transform_indices = @transform_2, window_bounds = array<i64: 32, 32>}, {pipeline_mode = #tpu.pipeline_mode<synchronous>, transform_indices = @transform_3, window_bounds = array<i64: 1, 32>}, {pipeline_mode = #tpu.pipeline_mode<synchronous>, transform_indices = @transform_4, window_bounds = array<i64: 32, 32>}, {pipeline_mode = #tpu.pipeline_mode<synchronous>, transform_indices = @transform_5, window_bounds = array<i64: 1, 32>}, {pipeline_mode = #tpu.pipeline_mode<synchronous>, transform_indices = @transform_6, window_bounds = array<i64: 32, 32>}, {pipeline_mode = #tpu.pipeline_mode<synchronous>, transform_indices = @transform_7, window_bounds = array<i64: 1, 32>}, {pipeline_mode = #tpu.pipeline_mode<synchronous>, transform_indices = @transform_8, window_bounds = array<i64: 32, 32>}, {pipeline_mode = #tpu.pipeline_mode<synchronous>, transform_indices = @transform_9, window_bounds = array<i64: 1, 32>}, {pipeline_mode = #tpu.pipeline_mode<synchronous>, transform_indices = @transform_10, window_bounds = array<i64: 32, 32>}, {pipeline_mode = #tpu.pipeline_mode<synchronous>, transform_indices = @transform_11, window_bounds = array<i64: 1, 32>}, {pipeline_mode = #tpu.pipeline_mode<synchronous>, transform_indices = @transform_12, window_bounds = array<i64: 32, 32>}, {pipeline_mode = #tpu.pipeline_mode<synchronous>, transform_indices = @transform_13, window_bounds = array<i64: 1, 32>}, {pipeline_mode = #tpu.pipeline_mode<synchronous>, transform_indices = @transform_14, window_bounds = array<i64: 32, 32>}, {pipeline_mode = #tpu.pipeline_mode<synchronous>, transform_indices = @transform_15, window_bounds = array<i64: 1, 32>}, {pipeline_mode = #tpu.pipeline_mode<synchronous>, transform_indices = @transform_16, window_bounds = array<i64: 32, 32>}, {pipeline_mode = #tpu.pipeline_mode<synchronous>, transform_indices = @transform_17, window_bounds = array<i64: 1, 32>}, {pipeline_mode = #tpu.pipeline_mode<synchronous>, transform_indices = @transform_18, window_bounds = array<i64: 32, 128>}, {pipeline_mode = #tpu.pipeline_mode<synchronous>, transform_indices = @transform_19, window_bounds = array<i64: 1, 128>}, {pipeline_mode = #tpu.pipeline_mode<synchronous>, transform_indices = @transform_20, window_bounds = array<i64: 128, 32>}, {pipeline_mode = #tpu.pipeline_mode<synchronous>, transform_indices = @transform_21, window_bounds = array<i64: 1, 32>}, {pipeline_mode = #tpu.pipeline_mode<synchronous>, transform_indices = @transform_22, window_bounds = array<i64: 1, 32>}, {pipeline_mode = #tpu.pipeline_mode<synchronous>, transform_indices = @transform_23, window_bounds = array<i64: 1, 32>}, {pipeline_mode = #tpu.pipeline_mode<synchronous>, transform_indices = @transform_24, window_bounds = array<i64: 1, 32>}, {pipeline_mode = #tpu.pipeline_mode<synchronous>, transform_indices = @transform_25, window_bounds = array<i64: 1, 32>}, {pipeline_mode = #tpu.pipeline_mode<synchronous>, transform_indices = @transform_26, window_bounds = array<i64: 1, 32>}, {pipeline_mode = #tpu.pipeline_mode<synchronous>, transform_indices = @transform_27, window_bounds = array<i64: 1, 32>}, {transform_indices = @transform_28, window_bounds = array<i64: 8, 32>}]} {
    %c0 = arith.constant 0 : index
    %c0_0 = arith.constant 0 : index
    %0 = vector.load %arg2[%c0, %c0_0] : memref<8x32xf32, #tpu.memory_space<vmem>>, vector<8x32xf32>
    %1 = arith.truncf %0 : vector<8x32xf32> to vector<8x32xbf16>
    %c0_1 = arith.constant 0 : index
    %c0_2 = arith.constant 0 : index
    %2 = vector.load %arg4[%c0_1, %c0_2] : memref<32x32xbf16, #tpu.memory_space<vmem>>, vector<32x32xbf16>
    %cst = arith.constant dense<0.000000e+00> : vector<8x32xf32>
    %3 = tpu.matmul %1, %2, %cst {dimension_numbers = #tpu.dot_dimension_numbers<[1], [0], [0], [1], [0, 0, 1, 1], [], []>} : vector<8x32xbf16>, vector<32x32xbf16>, vector<8x32xf32> -> vector<8x32xf32>
    %c0_3 = arith.constant 0 : index
    %c0_4 = arith.constant 0 : index
    %4 = vector.load %arg5[%c0_3, %c0_4] : memref<1x32xf32, #tpu.memory_space<vmem>>, vector<1x32xf32>
    %5 = vector.broadcast %4 : vector<1x32xf32> to vector<8x32xf32>
    %6 = arith.addf %3, %5 : vector<8x32xf32>
    %7 = arith.truncf %6 : vector<8x32xf32> to vector<8x32xbf16>
    %c0_5 = arith.constant 0 : index
    %c0_6 = arith.constant 0 : index
    %8 = vector.load %arg6[%c0_5, %c0_6] : memref<32x32xbf16, #tpu.memory_space<vmem>>, vector<32x32xbf16>
    %cst_7 = arith.constant dense<0.000000e+00> : vector<8x32xf32>
    %9 = tpu.matmul %1, %8, %cst_7 {dimension_numbers = #tpu.dot_dimension_numbers<[1], [0], [0], [1], [0, 0, 1, 1], [], []>} : vector<8x32xbf16>, vector<32x32xbf16>, vector<8x32xf32> -> vector<8x32xf32>
    %c0_8 = arith.constant 0 : index
    %c0_9 = arith.constant 0 : index
    %10 = vector.load %arg7[%c0_8, %c0_9] : memref<1x32xf32, #tpu.memory_space<vmem>>, vector<1x32xf32>
    %11 = vector.broadcast %10 : vector<1x32xf32> to vector<8x32xf32>
    %12 = arith.addf %9, %11 : vector<8x32xf32>
    %13 = arith.truncf %12 : vector<8x32xf32> to vector<8x32xbf16>
    %c0_10 = arith.constant 0 : index
    %c0_11 = arith.constant 0 : index
    %14 = vector.load %arg8[%c0_10, %c0_11] : memref<32x32xbf16, #tpu.memory_space<vmem>>, vector<32x32xbf16>
    %cst_12 = arith.constant dense<0.000000e+00> : vector<8x32xf32>
    %15 = tpu.matmul %1, %14, %cst_12 {dimension_numbers = #tpu.dot_dimension_numbers<[1], [0], [0], [1], [0, 0, 1, 1], [], []>} : vector<8x32xbf16>, vector<32x32xbf16>, vector<8x32xf32> -> vector<8x32xf32>
    %c0_13 = arith.constant 0 : index
    %c0_14 = arith.constant 0 : index
    %16 = vector.load %arg9[%c0_13, %c0_14] : memref<1x32xf32, #tpu.memory_space<vmem>>, vector<1x32xf32>
    %17 = vector.broadcast %16 : vector<1x32xf32> to vector<8x32xf32>
    %18 = arith.addf %15, %17 : vector<8x32xf32>
    %19 = arith.truncf %18 : vector<8x32xf32> to vector<8x32xbf16>
    %20 = vector.extract_strided_slice %7 {offsets = [0, 0], sizes = [8, 8], strides = [1, 1]} : vector<8x32xbf16> to vector<8x8xbf16>
    %21 = vector.extract_strided_slice %7 {offsets = [0, 8], sizes = [8, 8], strides = [1, 1]} : vector<8x32xbf16> to vector<8x8xbf16>
    %22 = vector.extract_strided_slice %7 {offsets = [0, 16], sizes = [8, 8], strides = [1, 1]} : vector<8x32xbf16> to vector<8x8xbf16>
    %23 = vector.extract_strided_slice %7 {offsets = [0, 24], sizes = [8, 8], strides = [1, 1]} : vector<8x32xbf16> to vector<8x8xbf16>
    %24 = vector.shape_cast %20 : vector<8x8xbf16> to vector<1x8x8xbf16>
    %25 = vector.shape_cast %21 : vector<8x8xbf16> to vector<1x8x8xbf16>
    %26 = vector.shape_cast %22 : vector<8x8xbf16> to vector<1x8x8xbf16>
    %27 = vector.shape_cast %23 : vector<8x8xbf16> to vector<1x8x8xbf16>
    %28 = tpu.concatenate %24, %25, %26, %27 in 0 : vector<1x8x8xbf16>, vector<1x8x8xbf16>, vector<1x8x8xbf16>, vector<1x8x8xbf16> -> vector<4x8x8xbf16>
    %29 = vector.extract_strided_slice %13 {offsets = [0, 0], sizes = [8, 8], strides = [1, 1]} : vector<8x32xbf16> to vector<8x8xbf16>
    %30 = vector.extract_strided_slice %13 {offsets = [0, 8], sizes = [8, 8], strides = [1, 1]} : vector<8x32xbf16> to vector<8x8xbf16>
    %31 = vector.extract_strided_slice %13 {offsets = [0, 16], sizes = [8, 8], strides = [1, 1]} : vector<8x32xbf16> to vector<8x8xbf16>
    %32 = vector.extract_strided_slice %13 {offsets = [0, 24], sizes = [8, 8], strides = [1, 1]} : vector<8x32xbf16> to vector<8x8xbf16>
    %33 = vector.shape_cast %29 : vector<8x8xbf16> to vector<1x8x8xbf16>
    %34 = vector.shape_cast %30 : vector<8x8xbf16> to vector<1x8x8xbf16>
    %35 = vector.shape_cast %31 : vector<8x8xbf16> to vector<1x8x8xbf16>
    %36 = vector.shape_cast %32 : vector<8x8xbf16> to vector<1x8x8xbf16>
    %37 = tpu.concatenate %33, %34, %35, %36 in 0 : vector<1x8x8xbf16>, vector<1x8x8xbf16>, vector<1x8x8xbf16>, vector<1x8x8xbf16> -> vector<4x8x8xbf16>
    %38 = vector.extract_strided_slice %19 {offsets = [0, 0], sizes = [8, 8], strides = [1, 1]} : vector<8x32xbf16> to vector<8x8xbf16>
    %39 = vector.extract_strided_slice %19 {offsets = [0, 8], sizes = [8, 8], strides = [1, 1]} : vector<8x32xbf16> to vector<8x8xbf16>
    %40 = vector.extract_strided_slice %19 {offsets = [0, 16], sizes = [8, 8], strides = [1, 1]} : vector<8x32xbf16> to vector<8x8xbf16>
    %41 = vector.extract_strided_slice %19 {offsets = [0, 24], sizes = [8, 8], strides = [1, 1]} : vector<8x32xbf16> to vector<8x8xbf16>
    %42 = vector.shape_cast %38 : vector<8x8xbf16> to vector<1x8x8xbf16>
    %43 = vector.shape_cast %39 : vector<8x8xbf16> to vector<1x8x8xbf16>
    %44 = vector.shape_cast %40 : vector<8x8xbf16> to vector<1x8x8xbf16>
    %45 = vector.shape_cast %41 : vector<8x8xbf16> to vector<1x8x8xbf16>
    %46 = tpu.concatenate %42, %43, %44, %45 in 0 : vector<1x8x8xbf16>, vector<1x8x8xbf16>, vector<1x8x8xbf16>, vector<1x8x8xbf16> -> vector<4x8x8xbf16>
    "tpu.trace_start"() <{level = 10 : i32, message = "gqe,gke->gqk"}> : () -> ()
    %cst_15 = arith.constant dense<0.000000e+00> : vector<4x8x8xf32>
    %47 = tpu.matmul %28, %37, %cst_15 {dimension_numbers = #tpu.dot_dimension_numbers<[2], [2], [1], [1], [0, 0, 0, 1, 1, 1], [0], [0]>} : vector<4x8x8xbf16>, vector<4x8x8xbf16>, vector<4x8x8xf32> -> vector<4x8x8xf32>
    "tpu.trace_stop"() : () -> ()
    %cst_16 = arith.constant dense<0xFF800000> : vector<4x8xf32>
    %48 = vector.multi_reduction <maximumf>, %47, %cst_16 [2] : vector<4x8x8xf32> to vector<4x8xf32>
    %49 = vector.shape_cast %48 : vector<4x8xf32> to vector<4x8x1xf32>
    %50 = vector.broadcast %49 : vector<4x8x1xf32> to vector<4x8x8xf32>
    %51 = arith.subf %47, %50 : vector<4x8x8xf32>
    %52 = math.exp %51 : vector<4x8x8xf32>
    %cst_17 = arith.constant dense<0.000000e+00> : vector<4x8xf32>
    %53 = vector.multi_reduction <add>, %52, %cst_17 [2] : vector<4x8x8xf32> to vector<4x8xf32>
    %54 = vector.shape_cast %53 : vector<4x8xf32> to vector<4x8x1xf32>
    %55 = tpu.reciprocal %54 {approx = true} : vector<4x8x1xf32> -> vector<4x8x1xf32>
    %56 = vector.broadcast %55 : vector<4x8x1xf32> to vector<4x8x8xf32>
    %57 = arith.mulf %52, %56 : vector<4x8x8xf32>
    %58 = arith.truncf %57 : vector<4x8x8xf32> to vector<4x8x8xbf16>
    "tpu.trace_start"() <{level = 10 : i32, message = "gqk,gke->gqe"}> : () -> ()
    %cst_18 = arith.constant dense<0.000000e+00> : vector<4x8x8xf32>
    %59 = tpu.matmul %58, %46, %cst_18 {dimension_numbers = #tpu.dot_dimension_numbers<[2], [1], [1], [2], [0, 0, 0, 1, 1, 2], [0], [0]>} : vector<4x8x8xbf16>, vector<4x8x8xbf16>, vector<4x8x8xf32> -> vector<4x8x8xf32>
    "tpu.trace_stop"() : () -> ()
    %60 = vector.extract_strided_slice %59 {offsets = [0, 0, 0], sizes = [1, 8, 8], strides = [1, 1, 1]} : vector<4x8x8xf32> to vector<1x8x8xf32>
    %61 = vector.extract_strided_slice %59 {offsets = [1, 0, 0], sizes = [1, 8, 8], strides = [1, 1, 1]} : vector<4x8x8xf32> to vector<1x8x8xf32>
    %62 = vector.extract_strided_slice %59 {offsets = [2, 0, 0], sizes = [1, 8, 8], strides = [1, 1, 1]} : vector<4x8x8xf32> to vector<1x8x8xf32>
    %63 = vector.extract_strided_slice %59 {offsets = [3, 0, 0], sizes = [1, 8, 8], strides = [1, 1, 1]} : vector<4x8x8xf32> to vector<1x8x8xf32>
    %64 = tpu.concatenate %60, %61, %62, %63 in 2 : vector<1x8x8xf32>, vector<1x8x8xf32>, vector<1x8x8xf32>, vector<1x8x8xf32> -> vector<1x8x32xf32>
    %65 = vector.shape_cast %64 : vector<1x8x32xf32> to vector<8x32xf32>
    %66 = arith.truncf %65 : vector<8x32xf32> to vector<8x32xbf16>
    %c0_19 = arith.constant 0 : index
    %c0_20 = arith.constant 0 : index
    %67 = vector.load %arg10[%c0_19, %c0_20] : memref<32x32xbf16, #tpu.memory_space<vmem>>, vector<32x32xbf16>
    %cst_21 = arith.constant dense<0.000000e+00> : vector<8x32xf32>
    %68 = tpu.matmul %66, %67, %cst_21 {dimension_numbers = #tpu.dot_dimension_numbers<[1], [0], [0], [1], [0, 0, 1, 1], [], []>} : vector<8x32xbf16>, vector<32x32xbf16>, vector<8x32xf32> -> vector<8x32xf32>
    %c0_22 = arith.constant 0 : index
    %c0_23 = arith.constant 0 : index
    %69 = vector.load %arg11[%c0_22, %c0_23] : memref<1x32xf32, #tpu.memory_space<vmem>>, vector<1x32xf32>
    %70 = vector.broadcast %69 : vector<1x32xf32> to vector<8x32xf32>
    %71 = arith.addf %68, %70 : vector<8x32xf32>
    %72 = arith.addf %0, %71 : vector<8x32xf32>
    %c0_24 = arith.constant 0 : index
    %c0_25 = arith.constant 0 : index
    %73 = vector.load %arg24[%c0_24, %c0_25] : memref<1x32xf32, #tpu.memory_space<vmem>>, vector<1x32xf32>
    %c0_26 = arith.constant 0 : index
    %c0_27 = arith.constant 0 : index
    %74 = vector.load %arg25[%c0_26, %c0_27] : memref<1x32xf32, #tpu.memory_space<vmem>>, vector<1x32xf32>
    %cst_28 = arith.constant dense<0.000000e+00> : vector<8xf32>
    %75 = vector.multi_reduction <add>, %72, %cst_28 [1] : vector<8x32xf32> to vector<8xf32>
    %76 = vector.shape_cast %75 : vector<8xf32> to vector<8x1xf32>
    %cst_29 = arith.constant 3.200000e+01 : f32
    %77 = vector.broadcast %cst_29 : f32 to vector<8x1xf32>
    %78 = arith.divf %76, %77 : vector<8x1xf32>
    %79 = vector.broadcast %78 : vector<8x1xf32> to vector<8x32xf32>
    %80 = arith.subf %72, %79 : vector<8x32xf32>
    %81 = arith.mulf %80, %80 : vector<8x32xf32>
    %cst_30 = arith.constant dense<0.000000e+00> : vector<8xf32>
    %82 = vector.multi_reduction <add>, %81, %cst_30 [1] : vector<8x32xf32> to vector<8xf32>
    %83 = vector.shape_cast %82 : vector<8xf32> to vector<8x1xf32>
    %cst_31 = arith.constant 3.200000e+01 : f32
    %84 = vector.broadcast %cst_31 : f32 to vector<8x1xf32>
    %85 = arith.divf %83, %84 : vector<8x1xf32>
    %cst_32 = arith.constant 9.99999974E-6 : f32
    %86 = vector.broadcast %cst_32 : f32 to vector<8x1xf32>
    %87 = arith.addf %85, %86 : vector<8x1xf32>
    %88 = math.rsqrt %87 : vector<8x1xf32>
    %89 = vector.broadcast %88 : vector<8x1xf32> to vector<8x32xf32>
    %90 = arith.mulf %80, %89 : vector<8x32xf32>
    %91 = vector.broadcast %73 : vector<1x32xf32> to vector<8x32xf32>
    %92 = arith.mulf %90, %91 : vector<8x32xf32>
    %93 = vector.broadcast %74 : vector<1x32xf32> to vector<8x32xf32>
    %94 = arith.addf %92, %93 : vector<8x32xf32>
    %95 = vector.shape_cast %94 : vector<8x32xf32> to vector<1x8x32xf32>
    %96 = vector.extract_strided_slice %95 {offsets = [0, 7, 0], sizes = [1, 1, 32], strides = [1, 1, 1]} : vector<1x8x32xf32> to vector<1x1x32xf32>
    %97 = vector.shape_cast %96 : vector<1x1x32xf32> to vector<1x32xf32>
    %c0_33 = arith.constant 0 : index
    %c0_34 = arith.constant 0 : index
    %98 = vector.load %arg3[%c0_33, %c0_34] : memref<8x32xf32, #tpu.memory_space<vmem>>, vector<8x32xf32>
    %99 = arith.truncf %98 : vector<8x32xf32> to vector<8x32xbf16>
    %100 = arith.truncf %97 : vector<1x32xf32> to vector<1x32xbf16>
    %c0_35 = arith.constant 0 : index
    %c0_36 = arith.constant 0 : index
    %101 = vector.load %arg12[%c0_35, %c0_36] : memref<32x32xbf16, #tpu.memory_space<vmem>>, vector<32x32xbf16>
    %cst_37 = arith.constant dense<0.000000e+00> : vector<1x32xf32>
    %102 = tpu.matmul %100, %101, %cst_37 {dimension_numbers = #tpu.dot_dimension_numbers<[1], [0], [0], [1], [0, 0, 1, 1], [], []>} : vector<1x32xbf16>, vector<32x32xbf16>, vector<1x32xf32> -> vector<1x32xf32>
    %c0_38 = arith.constant 0 : index
    %c0_39 = arith.constant 0 : index
    %103 = vector.load %arg13[%c0_38, %c0_39] : memref<1x32xf32, #tpu.memory_space<vmem>>, vector<1x32xf32>
    %104 = arith.addf %102, %103 : vector<1x32xf32>
    %105 = arith.truncf %104 : vector<1x32xf32> to vector<1x32xbf16>
    %c0_40 = arith.constant 0 : index
    %c0_41 = arith.constant 0 : index
    %106 = vector.load %arg14[%c0_40, %c0_41] : memref<32x32xbf16, #tpu.memory_space<vmem>>, vector<32x32xbf16>
    %cst_42 = arith.constant dense<0.000000e+00> : vector<8x32xf32>
    %107 = tpu.matmul %99, %106, %cst_42 {dimension_numbers = #tpu.dot_dimension_numbers<[1], [0], [0], [1], [0, 0, 1, 1], [], []>} : vector<8x32xbf16>, vector<32x32xbf16>, vector<8x32xf32> -> vector<8x32xf32>
    %c0_43 = arith.constant 0 : index
    %c0_44 = arith.constant 0 : index
    %108 = vector.load %arg15[%c0_43, %c0_44] : memref<1x32xf32, #tpu.memory_space<vmem>>, vector<1x32xf32>
    %109 = vector.broadcast %108 : vector<1x32xf32> to vector<8x32xf32>
    %110 = arith.addf %107, %109 : vector<8x32xf32>
    %111 = arith.truncf %110 : vector<8x32xf32> to vector<8x32xbf16>
    %c0_45 = arith.constant 0 : index
    %c0_46 = arith.constant 0 : index
    %112 = vector.load %arg16[%c0_45, %c0_46] : memref<32x32xbf16, #tpu.memory_space<vmem>>, vector<32x32xbf16>
    %cst_47 = arith.constant dense<0.000000e+00> : vector<8x32xf32>
    %113 = tpu.matmul %99, %112, %cst_47 {dimension_numbers = #tpu.dot_dimension_numbers<[1], [0], [0], [1], [0, 0, 1, 1], [], []>} : vector<8x32xbf16>, vector<32x32xbf16>, vector<8x32xf32> -> vector<8x32xf32>
    %c0_48 = arith.constant 0 : index
    %c0_49 = arith.constant 0 : index
    %114 = vector.load %arg17[%c0_48, %c0_49] : memref<1x32xf32, #tpu.memory_space<vmem>>, vector<1x32xf32>
    %115 = vector.broadcast %114 : vector<1x32xf32> to vector<8x32xf32>
    %116 = arith.addf %113, %115 : vector<8x32xf32>
    %117 = arith.truncf %116 : vector<8x32xf32> to vector<8x32xbf16>
    %118 = vector.extract_strided_slice %105 {offsets = [0, 0], sizes = [1, 8], strides = [1, 1]} : vector<1x32xbf16> to vector<1x8xbf16>
    %119 = vector.extract_strided_slice %105 {offsets = [0, 8], sizes = [1, 8], strides = [1, 1]} : vector<1x32xbf16> to vector<1x8xbf16>
    %120 = vector.extract_strided_slice %105 {offsets = [0, 16], sizes = [1, 8], strides = [1, 1]} : vector<1x32xbf16> to vector<1x8xbf16>
    %121 = vector.extract_strided_slice %105 {offsets = [0, 24], sizes = [1, 8], strides = [1, 1]} : vector<1x32xbf16> to vector<1x8xbf16>
    %122 = vector.shape_cast %118 : vector<1x8xbf16> to vector<1x1x8xbf16>
    %123 = vector.shape_cast %119 : vector<1x8xbf16> to vector<1x1x8xbf16>
    %124 = vector.shape_cast %120 : vector<1x8xbf16> to vector<1x1x8xbf16>
    %125 = vector.shape_cast %121 : vector<1x8xbf16> to vector<1x1x8xbf16>
    %126 = tpu.concatenate %122, %123, %124, %125 in 0 : vector<1x1x8xbf16>, vector<1x1x8xbf16>, vector<1x1x8xbf16>, vector<1x1x8xbf16> -> vector<4x1x8xbf16>
    %127 = vector.extract_strided_slice %111 {offsets = [0, 0], sizes = [8, 8], strides = [1, 1]} : vector<8x32xbf16> to vector<8x8xbf16>
    %128 = vector.extract_strided_slice %111 {offsets = [0, 8], sizes = [8, 8], strides = [1, 1]} : vector<8x32xbf16> to vector<8x8xbf16>
    %129 = vector.extract_strided_slice %111 {offsets = [0, 16], sizes = [8, 8], strides = [1, 1]} : vector<8x32xbf16> to vector<8x8xbf16>
    %130 = vector.extract_strided_slice %111 {offsets = [0, 24], sizes = [8, 8], strides = [1, 1]} : vector<8x32xbf16> to vector<8x8xbf16>
    %131 = vector.shape_cast %127 : vector<8x8xbf16> to vector<1x8x8xbf16>
    %132 = vector.shape_cast %128 : vector<8x8xbf16> to vector<1x8x8xbf16>
    %133 = vector.shape_cast %129 : vector<8x8xbf16> to vector<1x8x8xbf16>
    %134 = vector.shape_cast %130 : vector<8x8xbf16> to vector<1x8x8xbf16>
    %135 = tpu.concatenate %131, %132, %133, %134 in 0 : vector<1x8x8xbf16>, vector<1x8x8xbf16>, vector<1x8x8xbf16>, vector<1x8x8xbf16> -> vector<4x8x8xbf16>
    "tpu.trace_start"() <{level = 10 : i32, message = "hve,hke->hvk"}> : () -> ()
    %cst_50 = arith.constant dense<0.000000e+00> : vector<4x1x8xf32>
    %136 = tpu.matmul %126, %135, %cst_50 {dimension_numbers = #tpu.dot_dimension_numbers<[2], [2], [1], [1], [0, 0, 0, 1, 1, 1], [0], [0]>} : vector<4x1x8xbf16>, vector<4x8x8xbf16>, vector<4x1x8xf32> -> vector<4x1x8xf32>
    "tpu.trace_stop"() : () -> ()
    %cst_51 = arith.constant dense<0xFF800000> : vector<4x1xf32>
    %137 = vector.multi_reduction <maximumf>, %136, %cst_51 [2] : vector<4x1x8xf32> to vector<4x1xf32>
    %138 = vector.shape_cast %137 : vector<4x1xf32> to vector<4x1x1xf32>
    %139 = vector.broadcast %138 : vector<4x1x1xf32> to vector<4x1x8xf32>
    %140 = arith.subf %136, %139 : vector<4x1x8xf32>
    %141 = math.exp %140 : vector<4x1x8xf32>
    %cst_52 = arith.constant dense<0.000000e+00> : vector<4x1xf32>
    %142 = vector.multi_reduction <add>, %141, %cst_52 [2] : vector<4x1x8xf32> to vector<4x1xf32>
    %143 = vector.shape_cast %142 : vector<4x1xf32> to vector<4x1x1xf32>
    %144 = tpu.reciprocal %143 {approx = true} : vector<4x1x1xf32> -> vector<4x1x1xf32>
    %145 = vector.broadcast %144 : vector<4x1x1xf32> to vector<4x1x8xf32>
    %146 = arith.mulf %141, %145 : vector<4x1x8xf32>
    %147 = arith.truncf %146 : vector<4x1x8xf32> to vector<4x1x8xbf16>
    %148 = vector.extract_strided_slice %117 {offsets = [0, 0], sizes = [8, 8], strides = [1, 1]} : vector<8x32xbf16> to vector<8x8xbf16>
    %149 = vector.extract_strided_slice %117 {offsets = [0, 8], sizes = [8, 8], strides = [1, 1]} : vector<8x32xbf16> to vector<8x8xbf16>
    %150 = vector.extract_strided_slice %117 {offsets = [0, 16], sizes = [8, 8], strides = [1, 1]} : vector<8x32xbf16> to vector<8x8xbf16>
    %151 = vector.extract_strided_slice %117 {offsets = [0, 24], sizes = [8, 8], strides = [1, 1]} : vector<8x32xbf16> to vector<8x8xbf16>
    %152 = vector.shape_cast %148 : vector<8x8xbf16> to vector<1x8x8xbf16>
    %153 = vector.shape_cast %149 : vector<8x8xbf16> to vector<1x8x8xbf16>
    %154 = vector.shape_cast %150 : vector<8x8xbf16> to vector<1x8x8xbf16>
    %155 = vector.shape_cast %151 : vector<8x8xbf16> to vector<1x8x8xbf16>
    %156 = tpu.concatenate %152, %153, %154, %155 in 0 : vector<1x8x8xbf16>, vector<1x8x8xbf16>, vector<1x8x8xbf16>, vector<1x8x8xbf16> -> vector<4x8x8xbf16>
    "tpu.trace_start"() <{level = 10 : i32, message = "hvk,hke->hve"}> : () -> ()
    %cst_53 = arith.constant dense<0.000000e+00> : vector<4x1x8xf32>
    %157 = tpu.matmul %147, %156, %cst_53 {dimension_numbers = #tpu.dot_dimension_numbers<[2], [1], [1], [2], [0, 0, 0, 1, 1, 2], [0], [0]>} : vector<4x1x8xbf16>, vector<4x8x8xbf16>, vector<4x1x8xf32> -> vector<4x1x8xf32>
    "tpu.trace_stop"() : () -> ()
    %158 = vector.extract_strided_slice %157 {offsets = [0, 0, 0], sizes = [1, 1, 8], strides = [1, 1, 1]} : vector<4x1x8xf32> to vector<1x1x8xf32>
    %159 = vector.shape_cast %158 : vector<1x1x8xf32> to vector<1x8xf32>
    %160 = vector.extract_strided_slice %157 {offsets = [1, 0, 0], sizes = [1, 1, 8], strides = [1, 1, 1]} : vector<4x1x8xf32> to vector<1x1x8xf32>
    %161 = vector.shape_cast %160 : vector<1x1x8xf32> to vector<1x8xf32>
    %162 = vector.extract_strided_slice %157 {offsets = [2, 0, 0], sizes = [1, 1, 8], strides = [1, 1, 1]} : vector<4x1x8xf32> to vector<1x1x8xf32>
    %163 = vector.shape_cast %162 : vector<1x1x8xf32> to vector<1x8xf32>
    %164 = vector.extract_strided_slice %157 {offsets = [3, 0, 0], sizes = [1, 1, 8], strides = [1, 1, 1]} : vector<4x1x8xf32> to vector<1x1x8xf32>
    %165 = vector.shape_cast %164 : vector<1x1x8xf32> to vector<1x8xf32>
    %166 = tpu.concatenate %159, %161, %163, %165 in 1 : vector<1x8xf32>, vector<1x8xf32>, vector<1x8xf32>, vector<1x8xf32> -> vector<1x32xf32>
    %167 = arith.truncf %166 : vector<1x32xf32> to vector<1x32xbf16>
    %c0_54 = arith.constant 0 : index
    %c0_55 = arith.constant 0 : index
    %168 = vector.load %arg18[%c0_54, %c0_55] : memref<32x32xbf16, #tpu.memory_space<vmem>>, vector<32x32xbf16>
    %cst_56 = arith.constant dense<0.000000e+00> : vector<1x32xf32>
    %169 = tpu.matmul %167, %168, %cst_56 {dimension_numbers = #tpu.dot_dimension_numbers<[1], [0], [0], [1], [0, 0, 1, 1], [], []>} : vector<1x32xbf16>, vector<32x32xbf16>, vector<1x32xf32> -> vector<1x32xf32>
    %c0_57 = arith.constant 0 : index
    %c0_58 = arith.constant 0 : index
    %170 = vector.load %arg19[%c0_57, %c0_58] : memref<1x32xf32, #tpu.memory_space<vmem>>, vector<1x32xf32>
    %171 = arith.addf %169, %170 : vector<1x32xf32>
    %172 = arith.addf %97, %171 : vector<1x32xf32>
    %c0_59 = arith.constant 0 : index
    %c0_60 = arith.constant 0 : index
    %173 = vector.load %arg26[%c0_59, %c0_60] : memref<1x32xf32, #tpu.memory_space<vmem>>, vector<1x32xf32>
    %c0_61 = arith.constant 0 : index
    %c0_62 = arith.constant 0 : index
    %174 = vector.load %arg27[%c0_61, %c0_62] : memref<1x32xf32, #tpu.memory_space<vmem>>, vector<1x32xf32>
    %cst_63 = arith.constant dense<0.000000e+00> : vector<1xf32>
    %175 = vector.multi_reduction <add>, %172, %cst_63 [1] : vector<1x32xf32> to vector<1xf32>
    %176 = vector.shape_cast %175 : vector<1xf32> to vector<1x1xf32>
    %cst_64 = arith.constant 3.200000e+01 : f32
    %177 = vector.broadcast %cst_64 : f32 to vector<1x1xf32>
    %178 = arith.divf %176, %177 : vector<1x1xf32>
    %179 = vector.broadcast %178 : vector<1x1xf32> to vector<1x32xf32>
    %180 = arith.subf %172, %179 : vector<1x32xf32>
    %181 = arith.mulf %180, %180 : vector<1x32xf32>
    %cst_65 = arith.constant dense<0.000000e+00> : vector<1xf32>
    %182 = vector.multi_reduction <add>, %181, %cst_65 [1] : vector<1x32xf32> to vector<1xf32>
    %183 = vector.shape_cast %182 : vector<1xf32> to vector<1x1xf32>
    %cst_66 = arith.constant 3.200000e+01 : f32
    %184 = vector.broadcast %cst_66 : f32 to vector<1x1xf32>
    %185 = arith.divf %183, %184 : vector<1x1xf32>
    %cst_67 = arith.constant 9.99999974E-6 : f32
    %186 = vector.broadcast %cst_67 : f32 to vector<1x1xf32>
    %187 = arith.addf %185, %186 : vector<1x1xf32>
    %188 = math.rsqrt %187 : vector<1x1xf32>
    %189 = vector.broadcast %188 : vector<1x1xf32> to vector<1x32xf32>
    %190 = arith.mulf %180, %189 : vector<1x32xf32>
    %191 = arith.mulf %190, %173 : vector<1x32xf32>
    %192 = arith.addf %191, %174 : vector<1x32xf32>
    %193 = tpu.iota {dimensions = array<i32: 1>} : vector<1x8x1xi32>
    %c7_i32 = arith.constant 7 : i32
    %194 = vector.broadcast %c7_i32 : i32 to vector<1x8x1xi32>
    %195 = arith.cmpi eq, %193, %194 : vector<1x8x1xi32>
    %196 = vector.shape_cast %192 : vector<1x32xf32> to vector<1x1x32xf32>
    %197 = vector.shape_cast %94 : vector<8x32xf32> to vector<1x8x32xf32>
    %198 = vector.shape_cast %195 : vector<1x8x1xi1> to vector<1x8x1xi1>
    %199 = vector.broadcast %198 : vector<1x8x1xi1> to vector<1x8x32xi1>
    %200 = vector.shape_cast %196 : vector<1x1x32xf32> to vector<1x1x32xf32>
    %201 = vector.broadcast %200 : vector<1x1x32xf32> to vector<1x8x32xf32>
    %202 = arith.select %199, %201, %197 : vector<1x8x32xi1>, vector<1x8x32xf32>
    %203 = vector.shape_cast %202 : vector<1x8x32xf32> to vector<8x32xf32>
    %204 = arith.truncf %203 : vector<8x32xf32> to vector<8x32xbf16>
    %c0_68 = arith.constant 0 : index
    %c0_69 = arith.constant 0 : index
    %205 = vector.load %arg20[%c0_68, %c0_69] : memref<32x128xbf16, #tpu.memory_space<vmem>>, vector<32x128xbf16>
    %cst_70 = arith.constant dense<0.000000e+00> : vector<8x128xf32>
    %206 = tpu.matmul %204, %205, %cst_70 {dimension_numbers = #tpu.dot_dimension_numbers<[1], [0], [0], [1], [0, 0, 1, 1], [], []>} : vector<8x32xbf16>, vector<32x128xbf16>, vector<8x128xf32> -> vector<8x128xf32>
    %c0_71 = arith.constant 0 : index
    %c0_72 = arith.constant 0 : index
    %207 = vector.load %arg21[%c0_71, %c0_72] : memref<1x128xf32, #tpu.memory_space<vmem>>, vector<1x128xf32>
    %208 = vector.broadcast %207 : vector<1x128xf32> to vector<8x128xf32>
    %209 = arith.addf %206, %208 : vector<8x128xf32>
    %cst_73 = arith.constant 0.000000e+00 : f32
    %210 = vector.broadcast %cst_73 : f32 to vector<8x128xf32>
    %211 = arith.maximumf %209, %210 : vector<8x128xf32>
    %212 = arith.truncf %211 : vector<8x128xf32> to vector<8x128xbf16>
    %c0_74 = arith.constant 0 : index
    %c0_75 = arith.constant 0 : index
    %213 = vector.load %arg22[%c0_74, %c0_75] : memref<128x32xbf16, #tpu.memory_space<vmem>>, vector<128x32xbf16>
    %cst_76 = arith.constant dense<0.000000e+00> : vector<8x32xf32>
    %214 = tpu.matmul %212, %213, %cst_76 {dimension_numbers = #tpu.dot_dimension_numbers<[1], [0], [0], [1], [0, 0, 1, 1], [], []>} : vector<8x128xbf16>, vector<128x32xbf16>, vector<8x32xf32> -> vector<8x32xf32>
    %c0_77 = arith.constant 0 : index
    %c0_78 = arith.constant 0 : index
    %215 = vector.load %arg23[%c0_77, %c0_78] : memref<1x32xf32, #tpu.memory_space<vmem>>, vector<1x32xf32>
    %216 = vector.broadcast %215 : vector<1x32xf32> to vector<8x32xf32>
    %217 = arith.addf %214, %216 : vector<8x32xf32>
    %218 = arith.addf %203, %217 : vector<8x32xf32>
    %c0_79 = arith.constant 0 : index
    %c0_80 = arith.constant 0 : index
    %219 = vector.load %arg28[%c0_79, %c0_80] : memref<1x32xf32, #tpu.memory_space<vmem>>, vector<1x32xf32>
    %c0_81 = arith.constant 0 : index
    %c0_82 = arith.constant 0 : index
    %220 = vector.load %arg29[%c0_81, %c0_82] : memref<1x32xf32, #tpu.memory_space<vmem>>, vector<1x32xf32>
    %cst_83 = arith.constant dense<0.000000e+00> : vector<8xf32>
    %221 = vector.multi_reduction <add>, %218, %cst_83 [1] : vector<8x32xf32> to vector<8xf32>
    %222 = vector.shape_cast %221 : vector<8xf32> to vector<8x1xf32>
    %cst_84 = arith.constant 3.200000e+01 : f32
    %223 = vector.broadcast %cst_84 : f32 to vector<8x1xf32>
    %224 = arith.divf %222, %223 : vector<8x1xf32>
    %225 = vector.broadcast %224 : vector<8x1xf32> to vector<8x32xf32>
    %226 = arith.subf %218, %225 : vector<8x32xf32>
    %227 = arith.mulf %226, %226 : vector<8x32xf32>
    %cst_85 = arith.constant dense<0.000000e+00> : vector<8xf32>
    %228 = vector.multi_reduction <add>, %227, %cst_85 [1] : vector<8x32xf32> to vector<8xf32>
    %229 = vector.shape_cast %228 : vector<8xf32> to vector<8x1xf32>
    %cst_86 = arith.constant 3.200000e+01 : f32
    %230 = vector.broadcast %cst_86 : f32 to vector<8x1xf32>
    %231 = arith.divf %229, %230 : vector<8x1xf32>
    %cst_87 = arith.constant 9.99999974E-6 : f32
    %232 = vector.broadcast %cst_87 : f32 to vector<8x1xf32>
    %233 = arith.addf %231, %232 : vector<8x1xf32>
    %234 = math.rsqrt %233 : vector<8x1xf32>
    %235 = vector.broadcast %234 : vector<8x1xf32> to vector<8x32xf32>
    %236 = arith.mulf %226, %235 : vector<8x32xf32>
    %237 = vector.broadcast %219 : vector<1x32xf32> to vector<8x32xf32>
    %238 = arith.mulf %236, %237 : vector<8x32xf32>
    %239 = vector.broadcast %220 : vector<1x32xf32> to vector<8x32xf32>
    %240 = arith.addf %238, %239 : vector<8x32xf32>
    %c0_88 = arith.constant 0 : index
    %c0_89 = arith.constant 0 : index
    %241 = vector.load %arg30[%c0_88, %c0_89] : memref<8x32xf32, #tpu.memory_space<vmem>>, vector<8x32xf32>
    tpu.vector_store %arg30[%c0_88, %c0_89], %240 {strides = array<i32>} : memref<8x32xf32, #tpu.memory_space<vmem>>, vector<8x32xf32>,
    return
  }
  func.func @transform_0(%arg0: i32, %arg1: i32) -> (i32, i32) {
    %c2_i32 = arith.constant 2 : i32
    %0 = arith.muli %arg0, %c2_i32 : i32
    %1 = arith.addi %0, %arg1 : i32
    %c0_i32 = arith.constant 0 : i32
    %c0_i32_0 = arith.constant 0 : i32
    return %1, %c0_i32 : i32, i32
  }
  func.func @transform_1(%arg0: i32, %arg1: i32) -> (i32, i32) {
    %c0_i32 = arith.constant 0 : i32
    %c0_i32_0 = arith.constant 0 : i32
    return %arg0, %c0_i32 : i32, i32
  }
  func.func @transform_2(%arg0: i32, %arg1: i32) -> (i32, i32) {
    %c0_i32 = arith.constant 0 : i32
    %c0_i32_0 = arith.constant 0 : i32
    %c0_i32_1 = arith.constant 0 : i32
    return %c0_i32, %c0_i32_0 : i32, i32
  }
  func.func @transform_3(%arg0: i32, %arg1: i32) -> (i32, i32) {
    %c0_i32 = arith.constant 0 : i32
    %c0_i32_0 = arith.constant 0 : i32
    %c0_i32_1 = arith.constant 0 : i32
    return %c0_i32, %c0_i32_0 : i32, i32
  }
  func.func @transform_4(%arg0: i32, %arg1: i32) -> (i32, i32) {
    %c0_i32 = arith.constant 0 : i32
    %c0_i32_0 = arith.constant 0 : i32
    %c0_i32_1 = arith.constant 0 : i32
    return %c0_i32, %c0_i32_0 : i32, i32
  }
  func.func @transform_5(%arg0: i32, %arg1: i32) -> (i32, i32) {
    %c0_i32 = arith.constant 0 : i32
    %c0_i32_0 = arith.constant 0 : i32
    %c0_i32_1 = arith.constant 0 : i32
    return %c0_i32, %c0_i32_0 : i32, i32
  }
  func.func @transform_6(%arg0: i32, %arg1: i32) -> (i32, i32) {
    %c0_i32 = arith.constant 0 : i32
    %c0_i32_0 = arith.constant 0 : i32
    %c0_i32_1 = arith.constant 0 : i32
    return %c0_i32, %c0_i32_0 : i32, i32
  }
  func.func @transform_7(%arg0: i32, %arg1: i32) -> (i32, i32) {
    %c0_i32 = arith.constant 0 : i32
    %c0_i32_0 = arith.constant 0 : i32
    %c0_i32_1 = arith.constant 0 : i32
    return %c0_i32, %c0_i32_0 : i32, i32
  }
  func.func @transform_8(%arg0: i32, %arg1: i32) -> (i32, i32) {
    %c0_i32 = arith.constant 0 : i32
    %c0_i32_0 = arith.constant 0 : i32
    %c0_i32_1 = arith.constant 0 : i32
    return %c0_i32, %c0_i32_0 : i32, i32
  }
  func.func @transform_9(%arg0: i32, %arg1: i32) -> (i32, i32) {
    %c0_i32 = arith.constant 0 : i32
    %c0_i32_0 = arith.constant 0 : i32
    %c0_i32_1 = arith.constant 0 : i32
    return %c0_i32, %c0_i32_0 : i32, i32
  }
  func.func @transform_10(%arg0: i32, %arg1: i32) -> (i32, i32) {
    %c0_i32 = arith.constant 0 : i32
    %c0_i32_0 = arith.constant 0 : i32
    %c0_i32_1 = arith.constant 0 : i32
    return %c0_i32, %c0_i32_0 : i32, i32
  }
  func.func @transform_11(%arg0: i32, %arg1: i32) -> (i32, i32) {
    %c0_i32 = arith.constant 0 : i32
    %c0_i32_0 = arith.constant 0 : i32
    %c0_i32_1 = arith.constant 0 : i32
    return %c0_i32, %c0_i32_0 : i32, i32
  }
  func.func @transform_12(%arg0: i32, %arg1: i32) -> (i32, i32) {
    %c0_i32 = arith.constant 0 : i32
    %c0_i32_0 = arith.constant 0 : i32
    %c0_i32_1 = arith.constant 0 : i32
    return %c0_i32, %c0_i32_0 : i32, i32
  }
  func.func @transform_13(%arg0: i32, %arg1: i32) -> (i32, i32) {
    %c0_i32 = arith.constant 0 : i32
    %c0_i32_0 = arith.constant 0 : i32
    %c0_i32_1 = arith.constant 0 : i32
    return %c0_i32, %c0_i32_0 : i32, i32
  }
  func.func @transform_14(%arg0: i32, %arg1: i32) -> (i32, i32) {
    %c0_i32 = arith.constant 0 : i32
    %c0_i32_0 = arith.constant 0 : i32
    %c0_i32_1 = arith.constant 0 : i32
    return %c0_i32, %c0_i32_0 : i32, i32
  }
  func.func @transform_15(%arg0: i32, %arg1: i32) -> (i32, i32) {
    %c0_i32 = arith.constant 0 : i32
    %c0_i32_0 = arith.constant 0 : i32
    %c0_i32_1 = arith.constant 0 : i32
    return %c0_i32, %c0_i32_0 : i32, i32
  }
  func.func @transform_16(%arg0: i32, %arg1: i32) -> (i32, i32) {
    %c0_i32 = arith.constant 0 : i32
    %c0_i32_0 = arith.constant 0 : i32
    %c0_i32_1 = arith.constant 0 : i32
    return %c0_i32, %c0_i32_0 : i32, i32
  }
  func.func @transform_17(%arg0: i32, %arg1: i32) -> (i32, i32) {
    %c0_i32 = arith.constant 0 : i32
    %c0_i32_0 = arith.constant 0 : i32
    %c0_i32_1 = arith.constant 0 : i32
    return %c0_i32, %c0_i32_0 : i32, i32
  }
  func.func @transform_18(%arg0: i32, %arg1: i32) -> (i32, i32) {
    %c0_i32 = arith.constant 0 : i32
    %c0_i32_0 = arith.constant 0 : i32
    %c0_i32_1 = arith.constant 0 : i32
    return %c0_i32, %c0_i32_0 : i32, i32
  }
  func.func @transform_19(%arg0: i32, %arg1: i32) -> (i32, i32) {
    %c0_i32 = arith.constant 0 : i32
    %c0_i32_0 = arith.constant 0 : i32
    %c0_i32_1 = arith.constant 0 : i32
    return %c0_i32, %c0_i32_0 : i32, i32
  }
  func.func @transform_20(%arg0: i32, %arg1: i32) -> (i32, i32) {
    %c0_i32 = arith.constant 0 : i32
    %c0_i32_0 = arith.constant 0 : i32
    %c0_i32_1 = arith.constant 0 : i32
    return %c0_i32, %c0_i32_0 : i32, i32
  }
  func.func @transform_21(%arg0: i32, %arg1: i32) -> (i32, i32) {
    %c0_i32 = arith.constant 0 : i32
    %c0_i32_0 = arith.constant 0 : i32
    %c0_i32_1 = arith.constant 0 : i32
    return %c0_i32, %c0_i32_0 : i32, i32
  }
  func.func @transform_22(%arg0: i32, %arg1: i32) -> (i32, i32) {
    %c0_i32 = arith.constant 0 : i32
    %c0_i32_0 = arith.constant 0 : i32
    %c0_i32_1 = arith.constant 0 : i32
    return %c0_i32, %c0_i32_0 : i32, i32
  }
  func.func @transform_23(%arg0: i32, %arg1: i32) -> (i32, i32) {
    %c0_i32 = arith.constant 0 : i32
    %c0_i32_0 = arith.constant 0 : i32
    %c0_i32_1 = arith.constant 0 : i32
    return %c0_i32, %c0_i32_0 : i32, i32
  }
  func.func @transform_24(%arg0: i32, %arg1: i32) -> (i32, i32) {
    %c0_i32 = arith.constant 0 : i32
    %c0_i32_0 = arith.constant 0 : i32
    %c0_i32_1 = arith.constant 0 : i32
    return %c0_i32, %c0_i32_0 : i32, i32
  }
  func.func @transform_25(%arg0: i32, %arg1: i32) -> (i32, i32) {
    %c0_i32 = arith.constant 0 : i32
    %c0_i32_0 = arith.constant 0 : i32
    %c0_i32_1 = arith.constant 0 : i32
    return %c0_i32, %c0_i32_0 : i32, i32
  }
  func.func @transform_26(%arg0: i32, %arg1: i32) -> (i32, i32) {
    %c0_i32 = arith.constant 0 : i32
    %c0_i32_0 = arith.constant 0 : i32
    %c0_i32_1 = arith.constant 0 : i32
    return %c0_i32, %c0_i32_0 : i32, i32
  }
  func.func @transform_27(%arg0: i32, %arg1: i32) -> (i32, i32) {
    %c0_i32 = arith.constant 0 : i32
    %c0_i32_0 = arith.constant 0 : i32
    %c0_i32_1 = arith.constant 0 : i32
    return %c0_i32, %c0_i32_0 : i32, i32
  }
  func.func @transform_28(%arg0: i32, %arg1: i32) -> (i32, i32) {
    %c2_i32 = arith.constant 2 : i32
    %0 = arith.muli %arg0, %c2_i32 : i32
    %1 = arith.addi %0, %arg1 : i32
    %c0_i32 = arith.constant 0 : i32
    %c0_i32_0 = arith.constant 0 : i32
    return %1, %c0_i32 : i32, i32
  }
}

</mosaic_0001>

<llo_original>
// kernel: tpu_custom_call.1
$region0: #{tpu_custom_call.1}
  #allocation0 [shape = 'u32[]', space=smem, size = 0x4, offset = 0x4, fixed_abs, tag = 'smem constant byte address 0x4 - core index']
  #allocation1 [shape = 'u32[72,128]{1,0:T(1,128)}', space=vmem, size = 0x9000, scoped, tag = 'internal scratch']
  %s0 = inlined_call_operand.vmem [shape: f32[32,32], index: 0, kind: input, shape index: {}]
  %s1 = inlined_call_operand.vmem [shape: f32[16,32], index: 1, kind: input, shape index: {}]
  %s2 = inlined_call_operand.vmem [shape: bf16[32,32], index: 2, kind: input, shape index: {}]
  %s3 = inlined_call_operand.vmem [shape: f32[1,32], index: 3, kind: input, shape index: {}]
  %s4 = inlined_call_operand.vmem [shape: bf16[32,32], index: 4, kind: input, shape index: {}]
  %s5 = inlined_call_operand.vmem [shape: f32[1,32], index: 5, kind: input, shape index: {}]
  %s6 = inlined_call_operand.hbm [shape: bf16[32,32], index: 6, kind: input, shape index: {}]
  %s7 = inlined_call_operand.vmem [shape: f32[1,32], index: 7, kind: input, shape index: {}]
  %s8 = inlined_call_operand.hbm [shape: bf16[32,32], index: 8, kind: input, shape index: {}]
  %s9 = inlined_call_operand.hbm [shape: f32[1,32], index: 9, kind: input, shape index: {}]
  %s10 = inlined_call_operand.hbm [shape: bf16[32,32], index: 10, kind: input, shape index: {}]
  %s11 = inlined_call_operand.hbm [shape: f32[1,32], index: 11, kind: input, shape index: {}]
  %s12 = inlined_call_operand.hbm [shape: bf16[32,32], index: 12, kind: input, shape index: {}]
  %s13 = inlined_call_operand.hbm [shape: f32[1,32], index: 13, kind: input, shape index: {}]
  %s14 = inlined_call_operand.hbm [shape: bf16[32,32], index: 14, kind: input, shape index: {}]
  %s15 = inlined_call_operand.hbm [shape: f32[1,32], index: 15, kind: input, shape index: {}]
  %s16 = inlined_call_operand.hbm [shape: bf16[32,32], index: 16, kind: input, shape index: {}]
  %s17 = inlined_call_operand.hbm [shape: f32[1,32], index: 17, kind: input, shape index: {}]
  %s18 = inlined_call_operand.hbm [shape: bf16[32,128], index: 18, kind: input, shape index: {}]
  %s19 = inlined_call_operand.hbm [shape: f32[1,128], index: 19, kind: input, shape index: {}]
  %s20 = inlined_call_operand.vmem [shape: bf16[128,32], index: 20, kind: input, shape index: {}]
  %s21 = inlined_call_operand.hbm [shape: f32[1,32], index: 21, kind: input, shape index: {}]
  %s22 = inlined_call_operand.vmem [shape: f32[1,32], index: 22, kind: input, shape index: {}]
  %s23 = inlined_call_operand.vmem [shape: f32[1,32], index: 23, kind: input, shape index: {}]
  %s24 = inlined_call_operand.vmem [shape: f32[1,32], index: 24, kind: input, shape index: {}]
  %s25 = inlined_call_operand.vmem [shape: f32[1,32], index: 25, kind: input, shape index: {}]
  %s26 = inlined_call_operand.vmem [shape: f32[1,32], index: 26, kind: input, shape index: {}]
  %s27 = inlined_call_operand.hbm [shape: f32[1,32], index: 27, kind: input, shape index: {}]
  %s28 = inlined_call_operand.hbm [shape: f32[32,32], index: 28, kind: output, shape index: {}]
  %s29 = sld [smem:[#allocation0]]
  $region205: #{tpu_custom_call.1} parent=0
    _
  %s31 = ssub.s32 1, %s29
  %s32 = scalar_select 0, %s31, %s29
  $region1: #{tpu_custom_call.1} parent=0
    #allocation2 [shape = 'u8[8192]{0}', space=vmem, size = 0x2000, scoped, tag = 'input window, operand 6, single buffered']
    #allocation3 [shape = 's32[2]{0}', space=sflag, size = 0x8, scoped, tag = 'scoped memory for tpu_custom_call.1']
    #allocation4 [shape = 's32[2]{0}', space=sflag, size = 0x8, scoped, tag = 'scoped memory for tpu_custom_call.1']
    #allocation5 [shape = 'u8[8192]{0}', space=vmem, size = 0x2000, scoped, tag = 'input window, operand 8, single buffered']
    #allocation6 [shape = 's32[1]{0}', space=sflag, size = 0x4, scoped, tag = 'scoped memory for tpu_custom_call.1']
    #allocation7 [shape = 'u8[512]{0}', space=vmem, size = 0x400, scoped, tag = 'input window, operand 9, single buffered']
    #allocation8 [shape = 'u8[8192]{0}', space=vmem, size = 0x2000, scoped, tag = 'input window, operand 10, single buffered']
    #allocation9 [shape = 's32[1]{0}', space=sflag, size = 0x4, scoped, tag = 'scoped memory for tpu_custom_call.1']
    #allocation10 [shape = 'u8[512]{0}', space=vmem, size = 0x400, scoped, tag = 'input window, operand 11, single buffered']
    #allocation11 [shape = 'u8[8192]{0}', space=vmem, size = 0x2000, scoped, tag = 'input window, operand 12, single buffered']
    #allocation12 [shape = 's32[1]{0}', space=sflag, size = 0x4, scoped, tag = 'scoped memory for tpu_custom_call.1']
    #allocation13 [shape = 'u8[512]{0}', space=vmem, size = 0x400, scoped, tag = 'input window, operand 13, single buffered']
    #allocation14 [shape = 'u8[8192]{0}', space=vmem, size = 0x2000, scoped, tag = 'input window, operand 14, single buffered']
    #allocation15 [shape = 's32[1]{0}', space=sflag, size = 0x4, scoped, tag = 'scoped memory for tpu_custom_call.1']
    #allocation16 [shape = 'u8[512]{0}', space=vmem, size = 0x400, scoped, tag = 'input window, operand 15, single buffered']
    #allocation17 [shape = 'u8[8192]{0}', space=vmem, size = 0x2000, scoped, tag = 'input window, operand 16, single buffered']
    #allocation18 [shape = 's32[1]{0}', space=sflag, size = 0x4, scoped, tag = 'scoped memory for tpu_custom_call.1']
    #allocation19 [shape = 'u8[512]{0}', space=vmem, size = 0x400, scoped, tag = 'input window, operand 17, single buffered']
    #allocation20 [shape = 'u8[8192]{0}', space=vmem, size = 0x2000, scoped, tag = 'input window, operand 18, single buffered']
    #allocation21 [shape = 's32[1]{0}', space=sflag, size = 0x4, scoped, tag = 'scoped memory for tpu_custom_call.1']
    #allocation22 [shape = 'u8[512]{0}', space=vmem, size = 0x400, scoped, tag = 'input window, operand 19, single buffered']
    #allocation23 [shape = 'u8[512]{0}', space=vmem, size = 0x400, scoped, tag = 'input window, operand 21, single buffered']
    #allocation24 [shape = 's32[1]{0}', space=sflag, size = 0x4, scoped, tag = 'scoped memory for tpu_custom_call.1']
    #allocation25 [shape = 'u8[512]{0}', space=vmem, size = 0x400, scoped, tag = 'input window, operand 27, single buffered']
    #allocation26 [shape = 'u8[8192]{0}', space=vmem, size = 0x2000, scoped, tag = 'output window, operand 0']
    %33 = vsyncpa [#allocation3], 0
    %34 = vsyncpa [#allocation6], 0
    %35 = vsyncpa [#allocation9], 0
    %36 = vsyncpa [#allocation12], 0
    %37 = vsyncpa [#allocation15], 0
    %38 = vsyncpa [#allocation18], 0
    %39 = vsyncpa [#allocation21], 0
    %40 = vsyncpa [#allocation24], 0
    %41 = vsyncpa [#allocation4], 0
    %s42 = scalar_lea.sflag [#allocation4], 1
    %43 = vsyncpa %s42, 0
    loop: start=0, step=1, limit=6
    $region2: #{tpu_custom_call.1} parent=1 // loop_pre_header
      _
    $region3: #{tpu_custom_call.1} parent=1 // loop_header
      %s45 = sphi 0, %s49
      %p46 = scmp.ge.s32.totalorder %s45, 6
      %s52 = sphi 0, %s64
      %s53 = sphi 0, %s60
      %s54 = sphi 0, %s52
      %s55 = sphi 0, %s53
      %s56 = sphi 0, %s54
      %s57 = sphi 0, %s55
      %s71 = sphi 0, %s73
      %s74 = sphi 0, %s71
      %s75 = sphi 0, %s74
      %s91 = sphi 0, %s75
      %s97 = sphi 0, %s99
      %s100 = sphi 0, %s97
      %s101 = sphi 0, %s100
      %s117 = sphi 0, %s101
      %s121 = sphi 0, %s121
      %s123 = sphi 0, %s121
      %s124 = sphi 0, %s123
      %s138 = sphi 0, %s124
      %s142 = sphi 0, %s142
      %s144 = sphi 0, %s142
      %s145 = sphi 0, %s144
      %s159 = sphi 0, %s145
      %s163 = sphi 0, %s163
      %s165 = sphi 0, %s163
      %s166 = sphi 0, %s165
      %s180 = sphi 0, %s166
      %s184 = sphi 0, %s184
      %s186 = sphi 0, %s184
      %s187 = sphi 0, %s186
      %s201 = sphi 0, %s187
      %s205 = sphi 0, %s205
      %s207 = sphi 0, %s205
      %s208 = sphi 0, %s207
      %s222 = sphi 0, %s208
      %s226 = sphi 0, %s226
      %s228 = sphi 0, %s226
      %s229 = sphi 0, %s228
      %s243 = sphi 0, %s229
      %s247 = sphi 0, %s247
      %s249 = sphi 0, %s247
      %s250 = sphi 0, %s249
      %s264 = sphi 0, %s250
      %s268 = sphi 0, %s268
      %s270 = sphi 0, %s268
      %s271 = sphi 0, %s270
      %s285 = sphi 0, %s271
      %s289 = sphi 0, %s289
      %s291 = sphi 0, %s289
      %s292 = sphi 0, %s291
      %s306 = sphi 0, %s292
      %s310 = sphi 0, %s310
      %s312 = sphi 0, %s310
      %s313 = sphi 0, %s312
      %s327 = sphi 0, %s313
      %s331 = sphi 0, %s331
      %s333 = sphi 0, %s331
      %s334 = sphi 0, %s333
      %s348 = sphi 0, %s334
      %s352 = sphi 0, %s352
      %s354 = sphi 0, %s352
      %s355 = sphi 0, %s354
      %s369 = sphi 0, %s355
      %s373 = sphi 0, %s373
      %s375 = sphi 0, %s373
      %s376 = sphi 0, %s375
      %s390 = sphi 0, %s376
      %s394 = sphi 0, %s394
      %s396 = sphi 0, %s394
      %s397 = sphi 0, %s396
      %s411 = sphi 0, %s397
      %s415 = sphi 0, %s415
      %s417 = sphi 0, %s415
      %s418 = sphi 0, %s417
      %s432 = sphi 0, %s418
      %s436 = sphi 0, %s436
      %s438 = sphi 0, %s436
      %s439 = sphi 0, %s438
      %s453 = sphi 0, %s439
      %s457 = sphi 0, %s457
      %s459 = sphi 0, %s457
      %s460 = sphi 0, %s459
      %s474 = sphi 0, %s460
      %s478 = sphi 0, %s478
      %s480 = sphi 0, %s478
      %s481 = sphi 0, %s480
      %s495 = sphi 0, %s481
      %s499 = sphi 0, %s499
      %s501 = sphi 0, %s499
      %s502 = sphi 0, %s501
      %s516 = sphi 0, %s502
      %s520 = sphi 0, %s520
      %s522 = sphi 0, %s520
      %s523 = sphi 0, %s522
      %s537 = sphi 0, %s523
      %s541 = sphi 0, %s541
      %s543 = sphi 0, %s541
      %s544 = sphi 0, %s543
      %s558 = sphi 0, %s544
      %s562 = sphi 0, %s562
      %s564 = sphi 0, %s562
      %s565 = sphi 0, %s564
      %s579 = sphi 0, %s565
      %s583 = sphi 0, %s583
      %s585 = sphi 0, %s583
      %s586 = sphi 0, %s585
      %s600 = sphi 0, %s586
      %s604 = sphi 0, %s604
      %s606 = sphi 0, %s604
      %s607 = sphi 0, %s606
      %s621 = sphi 0, %s607
      %s625 = sphi 0, %s625
      %s627 = sphi 0, %s625
      %s628 = sphi 0, %s627
      %s642 = sphi 0, %s628
      %s646 = sphi 0, %s646
      %s648 = sphi 0, %s646
      %s649 = sphi 0, %s648
      %s663 = sphi 0, %s649
      %s673 = sphi 0, %s675
      %s676 = sphi 0, %s673
      %s677 = sphi 0, %s676
      %s693 = sphi 0, %s677
    $region4: #{tpu_custom_call.1} parent=1 // loop_header_branch
      %48 = sbr.rel (%p46) target = $region8
    $region5: #{tpu_custom_call.1} parent=1 // loop_body
      %s50 = ssub.s32 %s45, 1
      %s51 = ssub.s32 %s45, 2
      %s58 = sadd.s32 1, %s53
      %p59 = scmp.ge.s32.totalorder %s58, 2
      %s60 = scalar_select %p59, 0, %s58
      %s61 = sadd.s32 1, %s52
      %s62 = scalar_select %p59, %s61, %s52
      %p63 = scmp.ge.s32.totalorder %s62, 2
      %s64 = scalar_select %p63, 0, %s62
      %s65 = smul.u32 %s52, 2
      %s66 = sadd.s32 %s65, %s53
      %s67 = smul.u32 %s64, 2
      %s68 = sadd.s32 %s67, %s60
      %s69 = ssub.s32 %s66, %s68
      %p70 = scmp.eq.s32.totalorder %s69, 0
      %s72 = sadd.s32 %s71, 1
      %s73 = scalar_select %p70, %s71, %s72
      %p76 = pneg %p70
      %p77 = scmp.eq.s32.totalorder %s45, 3
      %p78 = por %p76, %p77
      %p79 = scmp.ne.s32.totalorder %s71, %s74
      %p80 = scmp.eq.s32.totalorder %s45, 0
      %p81 = por %p79, %p80
      %p82 = scmp.ne.s32.totalorder %s71, %s74
      %p83 = scmp.eq.s32.totalorder %s50, 3
      %p84 = por %p82, %p83
      %p85 = scmp.ne.s32.totalorder %s74, %s75
      %p86 = scmp.eq.s32.totalorder %s50, 0
      %p87 = por %p85, %p86
      %p88 = scmp.ne.s32.totalorder %s74, %s75
      %p89 = scmp.eq.s32.totalorder %s51, 3
      %p90 = por %p88, %p89
      %p92 = scmp.ne.s32.totalorder %s75, %s91
      %p93 = scmp.eq.s32.totalorder %s51, 0
      %p94 = por %p92, %p93
      %s95 = ssub.s32 %s52, %s64
      %p96 = scmp.eq.s32.totalorder %s95, 0
      %s98 = sadd.s32 %s97, 1
      %s99 = scalar_select %p96, %s97, %s98
      %p102 = pneg %p96
      %p103 = scmp.eq.s32.totalorder %s45, 3
      %p104 = por %p102, %p103
      %p105 = scmp.ne.s32.totalorder %s97, %s100
      %p106 = scmp.eq.s32.totalorder %s45, 0
      %p107 = por %p105, %p106
      %p108 = scmp.ne.s32.totalorder %s97, %s100
      %p109 = scmp.eq.s32.totalorder %s50, 3
      %p110 = por %p108, %p109
      %p111 = scmp.ne.s32.totalorder %s100, %s101
      %p112 = scmp.eq.s32.totalorder %s50, 0
      %p113 = por %p111, %p112
      %p114 = scmp.ne.s32.totalorder %s100, %s101
      %p115 = scmp.eq.s32.totalorder %s51, 3
      %p116 = por %p114, %p115
      %p118 = scmp.ne.s32.totalorder %s101, %s117
      %p119 = scmp.eq.s32.totalorder %s51, 0
      %p120 = por %p118, %p119
      %s122 = sadd.s32 %s121, 1
      %p125 = scmp.eq.s32.totalorder %s45, 3
      %p126 = scmp.ne.s32.totalorder %s121, %s123
      %p127 = scmp.eq.s32.totalorder %s45, 0
      %p128 = por %p126, %p127
      %p129 = scmp.ne.s32.totalorder %s121, %s123
      %p130 = scmp.eq.s32.totalorder %s50, 3
      %p131 = por %p129, %p130
      %p132 = scmp.ne.s32.totalorder %s123, %s124
      %p133 = scmp.eq.s32.totalorder %s50, 0
      %p134 = por %p132, %p133
      %p135 = scmp.ne.s32.totalorder %s123, %s124
      %p136 = scmp.eq.s32.totalorder %s51, 3
      %p137 = por %p135, %p136
      %p139 = scmp.ne.s32.totalorder %s124, %s138
      %p140 = scmp.eq.s32.totalorder %s51, 0
      %p141 = por %p139, %p140
      %s143 = sadd.s32 %s142, 1
      %p146 = scmp.eq.s32.totalorder %s45, 3
      %p147 = scmp.ne.s32.totalorder %s142, %s144
      %p148 = scmp.eq.s32.totalorder %s45, 0
      %p149 = por %p147, %p148
      %p150 = scmp.ne.s32.totalorder %s142, %s144
      %p151 = scmp.eq.s32.totalorder %s50, 3
      %p152 = por %p150, %p151
      %p153 = scmp.ne.s32.totalorder %s144, %s145
      %p154 = scmp.eq.s32.totalorder %s50, 0
      %p155 = por %p153, %p154
      %p156 = scmp.ne.s32.totalorder %s144, %s145
      %p157 = scmp.eq.s32.totalorder %s51, 3
      %p158 = por %p156, %p157
      %p160 = scmp.ne.s32.totalorder %s145, %s159
      %p161 = scmp.eq.s32.totalorder %s51, 0
      %p162 = por %p160, %p161
      %s164 = sadd.s32 %s163, 1
      %p167 = scmp.eq.s32.totalorder %s45, 3
      %p168 = scmp.ne.s32.totalorder %s163, %s165
      %p169 = scmp.eq.s32.totalorder %s45, 0
      %p170 = por %p168, %p169
      %p171 = scmp.ne.s32.totalorder %s163, %s165
      %p172 = scmp.eq.s32.totalorder %s50, 3
      %p173 = por %p171, %p172
      %p174 = scmp.ne.s32.totalorder %s165, %s166
      %p175 = scmp.eq.s32.totalorder %s50, 0
      %p176 = por %p174, %p175
      %p177 = scmp.ne.s32.totalorder %s165, %s166
      %p178 = scmp.eq.s32.totalorder %s51, 3
      %p179 = por %p177, %p178
      %p181 = scmp.ne.s32.totalorder %s166, %s180
      %p182 = scmp.eq.s32.totalorder %s51, 0
      %p183 = por %p181, %p182
      %s185 = sadd.s32 %s184, 1
      %p188 = scmp.eq.s32.totalorder %s45, 3
      %p189 = scmp.ne.s32.totalorder %s184, %s186
      %p190 = scmp.eq.s32.totalorder %s45, 0
      %p191 = por %p189, %p190
      %p192 = scmp.ne.s32.totalorder %s184, %s186
      %p193 = scmp.eq.s32.totalorder %s50, 3
      %p194 = por %p192, %p193
      %p195 = scmp.ne.s32.totalorder %s186, %s187
      %p196 = scmp.eq.s32.totalorder %s50, 0
      %p197 = por %p195, %p196
      %p198 = scmp.ne.s32.totalorder %s186, %s187
      %p199 = scmp.eq.s32.totalorder %s51, 3
      %p200 = por %p198, %p199
      %p202 = scmp.ne.s32.totalorder %s187, %s201
      %p203 = scmp.eq.s32.totalorder %s51, 0
      %p204 = por %p202, %p203
      %s206 = sadd.s32 %s205, 1
      %p209 = scmp.eq.s32.totalorder %s45, 3
      %p210 = scmp.ne.s32.totalorder %s205, %s207
      %p211 = scmp.eq.s32.totalorder %s45, 0
      %p212 = por %p210, %p211
      %p213 = scmp.ne.s32.totalorder %s205, %s207
      %p214 = scmp.eq.s32.totalorder %s50, 3
      %p215 = por %p213, %p214
      %p216 = scmp.ne.s32.totalorder %s207, %s208
      %p217 = scmp.eq.s32.totalorder %s50, 0
      %p218 = por %p216, %p217
      %p219 = scmp.ne.s32.totalorder %s207, %s208
      %p220 = scmp.eq.s32.totalorder %s51, 3
      %p221 = por %p219, %p220
      %p223 = scmp.ne.s32.totalorder %s208, %s222
      %p224 = scmp.eq.s32.totalorder %s51, 0
      %p225 = por %p223, %p224
      %s227 = sadd.s32 %s226, 1
      %p230 = scmp.eq.s32.totalorder %s45, 3
      %p231 = scmp.ne.s32.totalorder %s226, %s228
      %p232 = scmp.eq.s32.totalorder %s45, 0
      %p233 = por %p231, %p232
      %p234 = scmp.ne.s32.totalorder %s226, %s228
      %p235 = scmp.eq.s32.totalorder %s50, 3
      %p236 = por %p234, %p235
      %p237 = scmp.ne.s32.totalorder %s228, %s229
      %p238 = scmp.eq.s32.totalorder %s50, 0
      %p239 = por %p237, %p238
      %p240 = scmp.ne.s32.totalorder %s228, %s229
      %p241 = scmp.eq.s32.totalorder %s51, 3
      %p242 = por %p240, %p241
      %p244 = scmp.ne.s32.totalorder %s229, %s243
      %p245 = scmp.eq.s32.totalorder %s51, 0
      %p246 = por %p244, %p245
      %s248 = sadd.s32 %s247, 1
      %p251 = scmp.eq.s32.totalorder %s45, 3
      %p252 = scmp.ne.s32.totalorder %s247, %s249
      %p253 = scmp.eq.s32.totalorder %s45, 0
      %p254 = por %p252, %p253
      %p255 = scmp.ne.s32.totalorder %s247, %s249
      %p256 = scmp.eq.s32.totalorder %s50, 3
      %p257 = por %p255, %p256
      %p258 = scmp.ne.s32.totalorder %s249, %s250
      %p259 = scmp.eq.s32.totalorder %s50, 0
      %p260 = por %p258, %p259
      %p261 = scmp.ne.s32.totalorder %s249, %s250
      %p262 = scmp.eq.s32.totalorder %s51, 3
      %p263 = por %p261, %p262
      %p265 = scmp.ne.s32.totalorder %s250, %s264
      %p266 = scmp.eq.s32.totalorder %s51, 0
      %p267 = por %p265, %p266
      %s269 = sadd.s32 %s268, 1
      %p272 = scmp.eq.s32.totalorder %s45, 3
      %p273 = scmp.ne.s32.totalorder %s268, %s270
      %p274 = scmp.eq.s32.totalorder %s45, 0
      %p275 = por %p273, %p274
      %p276 = scmp.ne.s32.totalorder %s268, %s270
      %p277 = scmp.eq.s32.totalorder %s50, 3
      %p278 = por %p276, %p277
      %p279 = scmp.ne.s32.totalorder %s270, %s271
      %p280 = scmp.eq.s32.totalorder %s50, 0
      %p281 = por %p279, %p280
      %p282 = scmp.ne.s32.totalorder %s270, %s271
      %p283 = scmp.eq.s32.totalorder %s51, 3
      %p284 = por %p282, %p283
      %p286 = scmp.ne.s32.totalorder %s271, %s285
      %p287 = scmp.eq.s32.totalorder %s51, 0
      %p288 = por %p286, %p287
      %s290 = sadd.s32 %s289, 1
      %p293 = scmp.eq.s32.totalorder %s45, 3
      %p294 = scmp.ne.s32.totalorder %s289, %s291
      %p295 = scmp.eq.s32.totalorder %s45, 0
      %p296 = por %p294, %p295
      %p297 = scmp.ne.s32.totalorder %s289, %s291
      %p298 = scmp.eq.s32.totalorder %s50, 3
      %p299 = por %p297, %p298
      %p300 = scmp.ne.s32.totalorder %s291, %s292
      %p301 = scmp.eq.s32.totalorder %s50, 0
      %p302 = por %p300, %p301
      %p303 = scmp.ne.s32.totalorder %s291, %s292
      %p304 = scmp.eq.s32.totalorder %s51, 3
      %p305 = por %p303, %p304
      %p307 = scmp.ne.s32.totalorder %s292, %s306
      %p308 = scmp.eq.s32.totalorder %s51, 0
      %p309 = por %p307, %p308
      %s311 = sadd.s32 %s310, 1
      %p314 = scmp.eq.s32.totalorder %s45, 3
      %p315 = scmp.ne.s32.totalorder %s310, %s312
      %p316 = scmp.eq.s32.totalorder %s45, 0
      %p317 = por %p315, %p316
      %p318 = scmp.ne.s32.totalorder %s310, %s312
      %p319 = scmp.eq.s32.totalorder %s50, 3
      %p320 = por %p318, %p319
      %p321 = scmp.ne.s32.totalorder %s312, %s313
      %p322 = scmp.eq.s32.totalorder %s50, 0
      %p323 = por %p321, %p322
      %p324 = scmp.ne.s32.totalorder %s312, %s313
      %p325 = scmp.eq.s32.totalorder %s51, 3
      %p326 = por %p324, %p325
      %p328 = scmp.ne.s32.totalorder %s313, %s327
      %p329 = scmp.eq.s32.totalorder %s51, 0
      %p330 = por %p328, %p329
      %s332 = sadd.s32 %s331, 1
      %p335 = scmp.eq.s32.totalorder %s45, 3
      %p336 = scmp.ne.s32.totalorder %s331, %s333
      %p337 = scmp.eq.s32.totalorder %s45, 0
      %p338 = por %p336, %p337
      %p339 = scmp.ne.s32.totalorder %s331, %s333
      %p340 = scmp.eq.s32.totalorder %s50, 3
      %p341 = por %p339, %p340
      %p342 = scmp.ne.s32.totalorder %s333, %s334
      %p343 = scmp.eq.s32.totalorder %s50, 0
      %p344 = por %p342, %p343
      %p345 = scmp.ne.s32.totalorder %s333, %s334
      %p346 = scmp.eq.s32.totalorder %s51, 3
      %p347 = por %p345, %p346
      %p349 = scmp.ne.s32.totalorder %s334, %s348
      %p350 = scmp.eq.s32.totalorder %s51, 0
      %p351 = por %p349, %p350
      %s353 = sadd.s32 %s352, 1
      %p356 = scmp.eq.s32.totalorder %s45, 3
      %p357 = scmp.ne.s32.totalorder %s352, %s354
      %p358 = scmp.eq.s32.totalorder %s45, 0
      %p359 = por %p357, %p358
      %p360 = scmp.ne.s32.totalorder %s352, %s354
      %p361 = scmp.eq.s32.totalorder %s50, 3
      %p362 = por %p360, %p361
      %p363 = scmp.ne.s32.totalorder %s354, %s355
      %p364 = scmp.eq.s32.totalorder %s50, 0
      %p365 = por %p363, %p364
      %p366 = scmp.ne.s32.totalorder %s354, %s355
      %p367 = scmp.eq.s32.totalorder %s51, 3
      %p368 = por %p366, %p367
      %p370 = scmp.ne.s32.totalorder %s355, %s369
      %p371 = scmp.eq.s32.totalorder %s51, 0
      %p372 = por %p370, %p371
      %s374 = sadd.s32 %s373, 1
      %p377 = scmp.eq.s32.totalorder %s45, 3
      %p378 = scmp.ne.s32.totalorder %s373, %s375
      %p379 = scmp.eq.s32.totalorder %s45, 0
      %p380 = por %p378, %p379
      %p381 = scmp.ne.s32.totalorder %s373, %s375
      %p382 = scmp.eq.s32.totalorder %s50, 3
      %p383 = por %p381, %p382
      %p384 = scmp.ne.s32.totalorder %s375, %s376
      %p385 = scmp.eq.s32.totalorder %s50, 0
      %p386 = por %p384, %p385
      %p387 = scmp.ne.s32.totalorder %s375, %s376
      %p388 = scmp.eq.s32.totalorder %s51, 3
      %p389 = por %p387, %p388
      %p391 = scmp.ne.s32.totalorder %s376, %s390
      %p392 = scmp.eq.s32.totalorder %s51, 0
      %p393 = por %p391, %p392
      %s395 = sadd.s32 %s394, 1
      %p398 = scmp.eq.s32.totalorder %s45, 3
      %p399 = scmp.ne.s32.totalorder %s394, %s396
      %p400 = scmp.eq.s32.totalorder %s45, 0
      %p401 = por %p399, %p400
      %p402 = scmp.ne.s32.totalorder %s394, %s396
      %p403 = scmp.eq.s32.totalorder %s50, 3
      %p404 = por %p402, %p403
      %p405 = scmp.ne.s32.totalorder %s396, %s397
      %p406 = scmp.eq.s32.totalorder %s50, 0
      %p407 = por %p405, %p406
      %p408 = scmp.ne.s32.totalorder %s396, %s397
      %p409 = scmp.eq.s32.totalorder %s51, 3
      %p410 = por %p408, %p409
      %p412 = scmp.ne.s32.totalorder %s397, %s411
      %p413 = scmp.eq.s32.totalorder %s51, 0
      %p414 = por %p412, %p413
      %s416 = sadd.s32 %s415, 1
      %p419 = scmp.eq.s32.totalorder %s45, 3
      %p420 = scmp.ne.s32.totalorder %s415, %s417
      %p421 = scmp.eq.s32.totalorder %s45, 0
      %p422 = por %p420, %p421
      %p423 = scmp.ne.s32.totalorder %s415, %s417
      %p424 = scmp.eq.s32.totalorder %s50, 3
      %p425 = por %p423, %p424
      %p426 = scmp.ne.s32.totalorder %s417, %s418
      %p427 = scmp.eq.s32.totalorder %s50, 0
      %p428 = por %p426, %p427
      %p429 = scmp.ne.s32.totalorder %s417, %s418
      %p430 = scmp.eq.s32.totalorder %s51, 3
      %p431 = por %p429, %p430
      %p433 = scmp.ne.s32.totalorder %s418, %s432
      %p434 = scmp.eq.s32.totalorder %s51, 0
      %p435 = por %p433, %p434
      %s437 = sadd.s32 %s436, 1
      %p440 = scmp.eq.s32.totalorder %s45, 3
      %p441 = scmp.ne.s32.totalorder %s436, %s438
      %p442 = scmp.eq.s32.totalorder %s45, 0
      %p443 = por %p441, %p442
      %p444 = scmp.ne.s32.totalorder %s436, %s438
      %p445 = scmp.eq.s32.totalorder %s50, 3
      %p446 = por %p444, %p445
      %p447 = scmp.ne.s32.totalorder %s438, %s439
      %p448 = scmp.eq.s32.totalorder %s50, 0
      %p449 = por %p447, %p448
      %p450 = scmp.ne.s32.totalorder %s438, %s439
      %p451 = scmp.eq.s32.totalorder %s51, 3
      %p452 = por %p450, %p451
      %p454 = scmp.ne.s32.totalorder %s439, %s453
      %p455 = scmp.eq.s32.totalorder %s51, 0
      %p456 = por %p454, %p455
      %s458 = sadd.s32 %s457, 1
      %p461 = scmp.eq.s32.totalorder %s45, 3
      %p462 = scmp.ne.s32.totalorder %s457, %s459
      %p463 = scmp.eq.s32.totalorder %s45, 0
      %p464 = por %p462, %p463
      %p465 = scmp.ne.s32.totalorder %s457, %s459
      %p466 = scmp.eq.s32.totalorder %s50, 3
      %p467 = por %p465, %p466
      %p468 = scmp.ne.s32.totalorder %s459, %s460
      %p469 = scmp.eq.s32.totalorder %s50, 0
      %p470 = por %p468, %p469
      %p471 = scmp.ne.s32.totalorder %s459, %s460
      %p472 = scmp.eq.s32.totalorder %s51, 3
      %p473 = por %p471, %p472
      %p475 = scmp.ne.s32.totalorder %s460, %s474
      %p476 = scmp.eq.s32.totalorder %s51, 0
      %p477 = por %p475, %p476
      %s479 = sadd.s32 %s478, 1
      %p482 = scmp.eq.s32.totalorder %s45, 3
      %p483 = scmp.ne.s32.totalorder %s478, %s480
      %p484 = scmp.eq.s32.totalorder %s45, 0
      %p485 = por %p483, %p484
      %p486 = scmp.ne.s32.totalorder %s478, %s480
      %p487 = scmp.eq.s32.totalorder %s50, 3
      %p488 = por %p486, %p487
      %p489 = scmp.ne.s32.totalorder %s480, %s481
      %p490 = scmp.eq.s32.totalorder %s50, 0
      %p491 = por %p489, %p490
      %p492 = scmp.ne.s32.totalorder %s480, %s481
      %p493 = scmp.eq.s32.totalorder %s51, 3
      %p494 = por %p492, %p493
      %p496 = scmp.ne.s32.totalorder %s481, %s495
      %p497 = scmp.eq.s32.totalorder %s51, 0
      %p498 = por %p496, %p497
      %s500 = sadd.s32 %s499, 1
      %p503 = scmp.eq.s32.totalorder %s45, 3
      %p504 = scmp.ne.s32.totalorder %s499, %s501
      %p505 = scmp.eq.s32.totalorder %s45, 0
      %p506 = por %p504, %p505
      %p507 = scmp.ne.s32.totalorder %s499, %s501
      %p508 = scmp.eq.s32.totalorder %s50, 3
      %p509 = por %p507, %p508
      %p510 = scmp.ne.s32.totalorder %s501, %s502
      %p511 = scmp.eq.s32.totalorder %s50, 0
      %p512 = por %p510, %p511
      %p513 = scmp.ne.s32.totalorder %s501, %s502
      %p514 = scmp.eq.s32.totalorder %s51, 3
      %p515 = por %p513, %p514
      %p517 = scmp.ne.s32.totalorder %s502, %s516
      %p518 = scmp.eq.s32.totalorder %s51, 0
      %p519 = por %p517, %p518
      %s521 = sadd.s32 %s520, 1
      %p524 = scmp.eq.s32.totalorder %s45, 3
      %p525 = scmp.ne.s32.totalorder %s520, %s522
      %p526 = scmp.eq.s32.totalorder %s45, 0
      %p527 = por %p525, %p526
      %p528 = scmp.ne.s32.totalorder %s520, %s522
      %p529 = scmp.eq.s32.totalorder %s50, 3
      %p530 = por %p528, %p529
      %p531 = scmp.ne.s32.totalorder %s522, %s523
      %p532 = scmp.eq.s32.totalorder %s50, 0
      %p533 = por %p531, %p532
      %p534 = scmp.ne.s32.totalorder %s522, %s523
      %p535 = scmp.eq.s32.totalorder %s51, 3
      %p536 = por %p534, %p535
      %p538 = scmp.ne.s32.totalorder %s523, %s537
      %p539 = scmp.eq.s32.totalorder %s51, 0
      %p540 = por %p538, %p539
      %s542 = sadd.s32 %s541, 1
      %p545 = scmp.eq.s32.totalorder %s45, 3
      %p546 = scmp.ne.s32.totalorder %s541, %s543
      %p547 = scmp.eq.s32.totalorder %s45, 0
      %p548 = por %p546, %p547
      %p549 = scmp.ne.s32.totalorder %s541, %s543
      %p550 = scmp.eq.s32.totalorder %s50, 3
      %p551 = por %p549, %p550
      %p552 = scmp.ne.s32.totalorder %s543, %s544
      %p553 = scmp.eq.s32.totalorder %s50, 0
      %p554 = por %p552, %p553
      %p555 = scmp.ne.s32.totalorder %s543, %s544
      %p556 = scmp.eq.s32.totalorder %s51, 3
      %p557 = por %p555, %p556
      %p559 = scmp.ne.s32.totalorder %s544, %s558
      %p560 = scmp.eq.s32.totalorder %s51, 0
      %p561 = por %p559, %p560
      %s563 = sadd.s32 %s562, 1
      %p566 = scmp.eq.s32.totalorder %s45, 3
      %p567 = scmp.ne.s32.totalorder %s562, %s564
      %p568 = scmp.eq.s32.totalorder %s45, 0
      %p569 = por %p567, %p568
      %p570 = scmp.ne.s32.totalorder %s562, %s564
      %p571 = scmp.eq.s32.totalorder %s50, 3
      %p572 = por %p570, %p571
      %p573 = scmp.ne.s32.totalorder %s564, %s565
      %p574 = scmp.eq.s32.totalorder %s50, 0
      %p575 = por %p573, %p574
      %p576 = scmp.ne.s32.totalorder %s564, %s565
      %p577 = scmp.eq.s32.totalorder %s51, 3
      %p578 = por %p576, %p577
      %p580 = scmp.ne.s32.totalorder %s565, %s579
      %p581 = scmp.eq.s32.totalorder %s51, 0
      %p582 = por %p580, %p581
      %s584 = sadd.s32 %s583, 1
      %p587 = scmp.eq.s32.totalorder %s45, 3
      %p588 = scmp.ne.s32.totalorder %s583, %s585
      %p589 = scmp.eq.s32.totalorder %s45, 0
      %p590 = por %p588, %p589
      %p591 = scmp.ne.s32.totalorder %s583, %s585
      %p592 = scmp.eq.s32.totalorder %s50, 3
      %p593 = por %p591, %p592
      %p594 = scmp.ne.s32.totalorder %s585, %s586
      %p595 = scmp.eq.s32.totalorder %s50, 0
      %p596 = por %p594, %p595
      %p597 = scmp.ne.s32.totalorder %s585, %s586
      %p598 = scmp.eq.s32.totalorder %s51, 3
      %p599 = por %p597, %p598
      %p601 = scmp.ne.s32.totalorder %s586, %s600
      %p602 = scmp.eq.s32.totalorder %s51, 0
      %p603 = por %p601, %p602
      %s605 = sadd.s32 %s604, 1
      %p608 = scmp.eq.s32.totalorder %s45, 3
      %p609 = scmp.ne.s32.totalorder %s604, %s606
      %p610 = scmp.eq.s32.totalorder %s45, 0
      %p611 = por %p609, %p610
      %p612 = scmp.ne.s32.totalorder %s604, %s606
      %p613 = scmp.eq.s32.totalorder %s50, 3
      %p614 = por %p612, %p613
      %p615 = scmp.ne.s32.totalorder %s606, %s607
      %p616 = scmp.eq.s32.totalorder %s50, 0
      %p617 = por %p615, %p616
      %p618 = scmp.ne.s32.totalorder %s606, %s607
      %p619 = scmp.eq.s32.totalorder %s51, 3
      %p620 = por %p618, %p619
      %p622 = scmp.ne.s32.totalorder %s607, %s621
      %p623 = scmp.eq.s32.totalorder %s51, 0
      %p624 = por %p622, %p623
      %s626 = sadd.s32 %s625, 1
      %p629 = scmp.eq.s32.totalorder %s45, 3
      %p630 = scmp.ne.s32.totalorder %s625, %s627
      %p631 = scmp.eq.s32.totalorder %s45, 0
      %p632 = por %p630, %p631
      %p633 = scmp.ne.s32.totalorder %s625, %s627
      %p634 = scmp.eq.s32.totalorder %s50, 3
      %p635 = por %p633, %p634
      %p636 = scmp.ne.s32.totalorder %s627, %s628
      %p637 = scmp.eq.s32.totalorder %s50, 0
      %p638 = por %p636, %p637
      %p639 = scmp.ne.s32.totalorder %s627, %s628
      %p640 = scmp.eq.s32.totalorder %s51, 3
      %p641 = por %p639, %p640
      %p643 = scmp.ne.s32.totalorder %s628, %s642
      %p644 = scmp.eq.s32.totalorder %s51, 0
      %p645 = por %p643, %p644
      %s647 = sadd.s32 %s646, 1
      %p650 = scmp.eq.s32.totalorder %s45, 3
      %p651 = scmp.ne.s32.totalorder %s646, %s648
      %p652 = scmp.eq.s32.totalorder %s45, 0
      %p653 = por %p651, %p652
      %p654 = scmp.ne.s32.totalorder %s646, %s648
      %p655 = scmp.eq.s32.totalorder %s50, 3
      %p656 = por %p654, %p655
      %p657 = scmp.ne.s32.totalorder %s648, %s649
      %p658 = scmp.eq.s32.totalorder %s50, 0
      %p659 = por %p657, %p658
      %p660 = scmp.ne.s32.totalorder %s648, %s649
      %p661 = scmp.eq.s32.totalorder %s51, 3
      %p662 = por %p660, %p661
      %p664 = scmp.ne.s32.totalorder %s649, %s663
      %p665 = scmp.eq.s32.totalorder %s51, 0
      %p666 = por %p664, %p665
      %s667 = smul.u32 %s52, 2
      %s668 = sadd.s32 %s667, %s53
      %s669 = smul.u32 %s64, 2
      %s670 = sadd.s32 %s669, %s60
      %s671 = ssub.s32 %s668, %s670
      %p672 = scmp.eq.s32.totalorder %s671, 0
      %s674 = sadd.s32 %s673, 1
      %s675 = scalar_select %p672, %s673, %s674
      %p678 = pneg %p672
      %p679 = scmp.eq.s32.totalorder %s45, 3
      %p680 = por %p678, %p679
      %p681 = scmp.ne.s32.totalorder %s673, %s676
      %p682 = scmp.eq.s32.totalorder %s45, 0
      %p683 = por %p681, %p682
      %p684 = scmp.ne.s32.totalorder %s673, %s676
      %p685 = scmp.eq.s32.totalorder %s50, 3
      %p686 = por %p684, %p685
      %p687 = scmp.ne.s32.totalorder %s676, %s677
      %p688 = scmp.eq.s32.totalorder %s50, 0
      %p689 = por %p687, %p688
      %p690 = scmp.ne.s32.totalorder %s676, %s677
      %p691 = scmp.eq.s32.totalorder %s51, 3
      %p692 = por %p690, %p691
      %p694 = scmp.ne.s32.totalorder %s677, %s693
      %p695 = scmp.eq.s32.totalorder %s51, 0
      %p696 = por %p694, %p695
      %p697 = scmp.le.s32.totalorder 1, %s45
      %p698 = scmp.lt.s32.totalorder %s45, 5
      %p699 = pnand %p697, %p698
      %p700 = pneg %p699
      // Predicated region
      $region9: #{tpu_custom_call.1} parent=5 // pred_check
        _
      $region10: #{tpu_custom_call.1} parent=5 // pred_check_branch
        %702 = sbr.rel (%p699) target = $region12
      $region11: #{tpu_custom_call.1} parent=5 // pred_region
        %s703 = ssub.s32 %s45, 1
        // Predicated region
        $region13: #{tpu_custom_call.1} parent=11 // pred_check
          %p704 = pneg %p134
        $region14: #{tpu_custom_call.1} parent=11 // pred_check_branch
          %706 = sbr.rel (%p704) target = $region16
        $region15: #{tpu_custom_call.1} parent=11 // pred_region
          _
        $region16: #{tpu_custom_call.1} parent=11 // pred_fallthru
          _
        // Predicated region
        $region17: #{tpu_custom_call.1} parent=11 // pred_check
          %p707 = pneg %p155
        $region18: #{tpu_custom_call.1} parent=11 // pred_check_branch
          %709 = sbr.rel (%p707) target = $region20
        $region19: #{tpu_custom_call.1} parent=11 // pred_region
          _
        $region20: #{tpu_custom_call.1} parent=11 // pred_fallthru
          _
        // Predicated region
        $region21: #{tpu_custom_call.1} parent=11 // pred_check
          %p710 = pneg %p176
        $region22: #{tpu_custom_call.1} parent=11 // pred_check_branch
          %712 = sbr.rel (%p710) target = $region24
        $region23: #{tpu_custom_call.1} parent=11 // pred_region
          _
        $region24: #{tpu_custom_call.1} parent=11 // pred_fallthru
          _
        // Predicated region
        $region25: #{tpu_custom_call.1} parent=11 // pred_check
          %p713 = pneg %p197
        $region26: #{tpu_custom_call.1} parent=11 // pred_check_branch
          %715 = sbr.rel (%p713) target = $region28
        $region27: #{tpu_custom_call.1} parent=11 // pred_region
          _
        $region28: #{tpu_custom_call.1} parent=11 // pred_fallthru
          _
        // Predicated region
        $region29: #{tpu_custom_call.1} parent=11 // pred_check
          %p716 = pneg %p218
        $region30: #{tpu_custom_call.1} parent=11 // pred_check_branch
          %718 = sbr.rel (%p716) target = $region32
        $region31: #{tpu_custom_call.1} parent=11 // pred_region
          %720 = vsyncadd [#allocation3], 0
          %s721 = sshll.u32 %s6, 4
          %s722 = int_to_ptr.hbm [resolvable:$true] %s721
          %s723 = sshll.u32 [#allocation2], 4
          %s724 = int_to_ptr.vmem [resolvable:$true] %s723
          %729 = dma.hbm_to_vmem [thread:$0]  %s722, 256, %s724, [#allocation3], 64, 64, 4
        $region32: #{tpu_custom_call.1} parent=11 // pred_fallthru
          _
        // Predicated region
        $region33: #{tpu_custom_call.1} parent=11 // pred_check
          %p730 = pneg %p239
        $region34: #{tpu_custom_call.1} parent=11 // pred_check_branch
          %732 = sbr.rel (%p730) target = $region36
        $region35: #{tpu_custom_call.1} parent=11 // pred_region
          _
        $region36: #{tpu_custom_call.1} parent=11 // pred_fallthru
          _
        // Predicated region
        $region37: #{tpu_custom_call.1} parent=11 // pred_check
          %p733 = pneg %p260
        $region38: #{tpu_custom_call.1} parent=11 // pred_check_branch
          %735 = sbr.rel (%p733) target = $region40
        $region39: #{tpu_custom_call.1} parent=11 // pred_region
          %737 = vsyncadd [#allocation6], 0
          %s738 = sshll.u32 %s8, 4
          %s739 = int_to_ptr.hbm [resolvable:$true] %s738
          %s740 = sshll.u32 [#allocation5], 4
          %s741 = int_to_ptr.vmem [resolvable:$true] %s740
          %746 = dma.hbm_to_vmem [thread:$0]  %s739, 256, %s741, [#allocation6], 64, 64, 4
        $region40: #{tpu_custom_call.1} parent=11 // pred_fallthru
          _
        // Predicated region
        $region41: #{tpu_custom_call.1} parent=11 // pred_check
          %p747 = pneg %p281
        $region42: #{tpu_custom_call.1} parent=11 // pred_check_branch
          %749 = sbr.rel (%p747) target = $region44
        $region43: #{tpu_custom_call.1} parent=11 // pred_region
          %751 = vsyncadd [#allocation6], 0
          %s753 = sshll.u32 %s9, 4
          %s754 = int_to_ptr.hbm [resolvable:$true] %s753
          %s755 = sshll.u32 [#allocation7], 4
          %s756 = int_to_ptr.vmem [resolvable:$true] %s755
          %758 = dma.hbm_to_vmem [thread:$0]  %s754, 16, %s756, [#allocation6]
        $region44: #{tpu_custom_call.1} parent=11 // pred_fallthru
          _
        // Predicated region
        $region45: #{tpu_custom_call.1} parent=11 // pred_check
          %p759 = pneg %p302
        $region46: #{tpu_custom_call.1} parent=11 // pred_check_branch
          %761 = sbr.rel (%p759) target = $region48
        $region47: #{tpu_custom_call.1} parent=11 // pred_region
          %763 = vsyncadd [#allocation9], 0
          %s764 = sshll.u32 %s10, 4
          %s765 = int_to_ptr.hbm [resolvable:$true] %s764
          %s766 = sshll.u32 [#allocation8], 4
          %s767 = int_to_ptr.vmem [resolvable:$true] %s766
          %772 = dma.hbm_to_vmem [thread:$0]  %s765, 256, %s767, [#allocation9], 64, 64, 4
        $region48: #{tpu_custom_call.1} parent=11 // pred_fallthru
          _
        // Predicated region
        $region49: #{tpu_custom_call.1} parent=11 // pred_check
          %p773 = pneg %p323
        $region50: #{tpu_custom_call.1} parent=11 // pred_check_branch
          %775 = sbr.rel (%p773) target = $region52
        $region51: #{tpu_custom_call.1} parent=11 // pred_region
          %777 = vsyncadd [#allocation9], 0
          %s779 = sshll.u32 %s11, 4
          %s780 = int_to_ptr.hbm [resolvable:$true] %s779
          %s781 = sshll.u32 [#allocation10], 4
          %s782 = int_to_ptr.vmem [resolvable:$true] %s781
          %784 = dma.hbm_to_vmem [thread:$0]  %s780, 16, %s782, [#allocation9]
        $region52: #{tpu_custom_call.1} parent=11 // pred_fallthru
          _
        // Predicated region
        $region53: #{tpu_custom_call.1} parent=11 // pred_check
          %p785 = pneg %p344
        $region54: #{tpu_custom_call.1} parent=11 // pred_check_branch
          %787 = sbr.rel (%p785) target = $region56
        $region55: #{tpu_custom_call.1} parent=11 // pred_region
          %789 = vsyncadd [#allocation12], 0
          %s790 = sshll.u32 %s12, 4
          %s791 = int_to_ptr.hbm [resolvable:$true] %s790
          %s792 = sshll.u32 [#allocation11], 4
          %s793 = int_to_ptr.vmem [resolvable:$true] %s792
          %798 = dma.hbm_to_vmem [thread:$0]  %s791, 256, %s793, [#allocation12], 64, 64, 4
        $region56: #{tpu_custom_call.1} parent=11 // pred_fallthru
          _
        // Predicated region
        $region57: #{tpu_custom_call.1} parent=11 // pred_check
          %p799 = pneg %p365
        $region58: #{tpu_custom_call.1} parent=11 // pred_check_branch
          %801 = sbr.rel (%p799) target = $region60
        $region59: #{tpu_custom_call.1} parent=11 // pred_region
          %803 = vsyncadd [#allocation12], 0
          %s805 = sshll.u32 %s13, 4
          %s806 = int_to_ptr.hbm [resolvable:$true] %s805
          %s807 = sshll.u32 [#allocation13], 4
          %s808 = int_to_ptr.vmem [resolvable:$true] %s807
          %810 = dma.hbm_to_vmem [thread:$0]  %s806, 16, %s808, [#allocation12]
        $region60: #{tpu_custom_call.1} parent=11 // pred_fallthru
          _
        // Predicated region
        $region61: #{tpu_custom_call.1} parent=11 // pred_check
          %p811 = pneg %p386
        $region62: #{tpu_custom_call.1} parent=11 // pred_check_branch
          %813 = sbr.rel (%p811) target = $region64
        $region63: #{tpu_custom_call.1} parent=11 // pred_region
          %815 = vsyncadd [#allocation15], 0
          %s816 = sshll.u32 %s14, 4
          %s817 = int_to_ptr.hbm [resolvable:$true] %s816
          %s818 = sshll.u32 [#allocation14], 4
          %s819 = int_to_ptr.vmem [resolvable:$true] %s818
          %824 = dma.hbm_to_vmem [thread:$0]  %s817, 256, %s819, [#allocation15], 64, 64, 4
        $region64: #{tpu_custom_call.1} parent=11 // pred_fallthru
          _
        // Predicated region
        $region65: #{tpu_custom_call.1} parent=11 // pred_check
          %p825 = pneg %p407
        $region66: #{tpu_custom_call.1} parent=11 // pred_check_branch
          %827 = sbr.rel (%p825) target = $region68
        $region67: #{tpu_custom_call.1} parent=11 // pred_region
          %829 = vsyncadd [#allocation15], 0
          %s831 = sshll.u32 %s15, 4
          %s832 = int_to_ptr.hbm [resolvable:$true] %s831
          %s833 = sshll.u32 [#allocation16], 4
          %s834 = int_to_ptr.vmem [resolvable:$true] %s833
          %836 = dma.hbm_to_vmem [thread:$0]  %s832, 16, %s834, [#allocation15]
        $region68: #{tpu_custom_call.1} parent=11 // pred_fallthru
          _
        // Predicated region
        $region69: #{tpu_custom_call.1} parent=11 // pred_check
          %p837 = pneg %p428
        $region70: #{tpu_custom_call.1} parent=11 // pred_check_branch
          %839 = sbr.rel (%p837) target = $region72
        $region71: #{tpu_custom_call.1} parent=11 // pred_region
          %841 = vsyncadd [#allocation18], 0
          %s842 = sshll.u32 %s16, 4
          %s843 = int_to_ptr.hbm [resolvable:$true] %s842
          %s844 = sshll.u32 [#allocation17], 4
          %s845 = int_to_ptr.vmem [resolvable:$true] %s844
          %850 = dma.hbm_to_vmem [thread:$0]  %s843, 256, %s845, [#allocation18], 64, 64, 4
        $region72: #{tpu_custom_call.1} parent=11 // pred_fallthru
          _
        // Predicated region
        $region73: #{tpu_custom_call.1} parent=11 // pred_check
          %p851 = pneg %p449
        $region74: #{tpu_custom_call.1} parent=11 // pred_check_branch
          %853 = sbr.rel (%p851) target = $region76
        $region75: #{tpu_custom_call.1} parent=11 // pred_region
          %855 = vsyncadd [#allocation18], 0
          %s857 = sshll.u32 %s17, 4
          %s858 = int_to_ptr.hbm [resolvable:$true] %s857
          %s859 = sshll.u32 [#allocation19], 4
          %s860 = int_to_ptr.vmem [resolvable:$true] %s859
          %862 = dma.hbm_to_vmem [thread:$0]  %s858, 16, %s860, [#allocation18]
        $region76: #{tpu_custom_call.1} parent=11 // pred_fallthru
          _
        // Predicated region
        $region77: #{tpu_custom_call.1} parent=11 // pred_check
          %p863 = pneg %p470
        $region78: #{tpu_custom_call.1} parent=11 // pred_check_branch
          %865 = sbr.rel (%p863) target = $region80
        $region79: #{tpu_custom_call.1} parent=11 // pred_region
          %867 = vsyncadd [#allocation21], 0
          %s868 = sshll.u32 %s18, 4
          %s869 = int_to_ptr.hbm [resolvable:$true] %s868
          %s870 = sshll.u32 [#allocation20], 4
          %s871 = int_to_ptr.vmem [resolvable:$true] %s870
          %876 = dma.hbm_to_vmem [thread:$0]  %s869, 256, %s871, [#allocation21], 64, 64, 4
        $region80: #{tpu_custom_call.1} parent=11 // pred_fallthru
          _
        // Predicated region
        $region81: #{tpu_custom_call.1} parent=11 // pred_check
          %p877 = pneg %p491
        $region82: #{tpu_custom_call.1} parent=11 // pred_check_branch
          %879 = sbr.rel (%p877) target = $region84
        $region83: #{tpu_custom_call.1} parent=11 // pred_region
          %881 = vsyncadd [#allocation21], 0
          %s883 = sshll.u32 %s19, 4
          %s884 = int_to_ptr.hbm [resolvable:$true] %s883
          %s885 = sshll.u32 [#allocation22], 4
          %s886 = int_to_ptr.vmem [resolvable:$true] %s885
          %888 = dma.hbm_to_vmem [thread:$0]  %s884, 16, %s886, [#allocation21]
        $region84: #{tpu_custom_call.1} parent=11 // pred_fallthru
          _
        // Predicated region
        $region85: #{tpu_custom_call.1} parent=11 // pred_check
          %p889 = pneg %p512
        $region86: #{tpu_custom_call.1} parent=11 // pred_check_branch
          %891 = sbr.rel (%p889) target = $region88
        $region87: #{tpu_custom_call.1} parent=11 // pred_region
          _
        $region88: #{tpu_custom_call.1} parent=11 // pred_fallthru
          _
        // Predicated region
        $region89: #{tpu_custom_call.1} parent=11 // pred_check
          %p892 = pneg %p533
        $region90: #{tpu_custom_call.1} parent=11 // pred_check_branch
          %894 = sbr.rel (%p892) target = $region92
        $region91: #{tpu_custom_call.1} parent=11 // pred_region
          %896 = vsyncadd [#allocation24], 0
          %s898 = sshll.u32 %s21, 4
          %s899 = int_to_ptr.hbm [resolvable:$true] %s898
          %s900 = sshll.u32 [#allocation23], 4
          %s901 = int_to_ptr.vmem [resolvable:$true] %s900
          %903 = dma.hbm_to_vmem [thread:$0]  %s899, 16, %s901, [#allocation24]
        $region92: #{tpu_custom_call.1} parent=11 // pred_fallthru
          _
        // Predicated region
        $region93: #{tpu_custom_call.1} parent=11 // pred_check
          %p904 = pneg %p554
        $region94: #{tpu_custom_call.1} parent=11 // pred_check_branch
          %906 = sbr.rel (%p904) target = $region96
        $region95: #{tpu_custom_call.1} parent=11 // pred_region
          _
        $region96: #{tpu_custom_call.1} parent=11 // pred_fallthru
          _
        // Predicated region
        $region97: #{tpu_custom_call.1} parent=11 // pred_check
          %p907 = pneg %p575
        $region98: #{tpu_custom_call.1} parent=11 // pred_check_branch
          %909 = sbr.rel (%p907) target = $region100
        $region99: #{tpu_custom_call.1} parent=11 // pred_region
          _
        $region100: #{tpu_custom_call.1} parent=11 // pred_fallthru
          _
        // Predicated region
        $region101: #{tpu_custom_call.1} parent=11 // pred_check
          %p910 = pneg %p596
        $region102: #{tpu_custom_call.1} parent=11 // pred_check_branch
          %912 = sbr.rel (%p910) target = $region104
        $region103: #{tpu_custom_call.1} parent=11 // pred_region
          _
        $region104: #{tpu_custom_call.1} parent=11 // pred_fallthru
          _
        // Predicated region
        $region105: #{tpu_custom_call.1} parent=11 // pred_check
          %p913 = pneg %p617
        $region106: #{tpu_custom_call.1} parent=11 // pred_check_branch
          %915 = sbr.rel (%p913) target = $region108
        $region107: #{tpu_custom_call.1} parent=11 // pred_region
          _
        $region108: #{tpu_custom_call.1} parent=11 // pred_fallthru
          _
        // Predicated region
        $region109: #{tpu_custom_call.1} parent=11 // pred_check
          %p916 = pneg %p638
        $region110: #{tpu_custom_call.1} parent=11 // pred_check_branch
          %918 = sbr.rel (%p916) target = $region112
        $region111: #{tpu_custom_call.1} parent=11 // pred_region
          _
        $region112: #{tpu_custom_call.1} parent=11 // pred_fallthru
          _
        // Predicated region
        $region113: #{tpu_custom_call.1} parent=11 // pred_check
          %p919 = pneg %p659
        $region114: #{tpu_custom_call.1} parent=11 // pred_check_branch
          %921 = sbr.rel (%p919) target = $region116
        $region115: #{tpu_custom_call.1} parent=11 // pred_region
          %923 = vsyncadd [#allocation24], 0
          %s925 = sshll.u32 %s27, 4
          %s926 = int_to_ptr.hbm [resolvable:$true] %s925
          %s927 = sshll.u32 [#allocation25], 4
          %s928 = int_to_ptr.vmem [resolvable:$true] %s927
          %930 = dma.hbm_to_vmem [thread:$0]  %s926, 16, %s928, [#allocation24]
        $region116: #{tpu_custom_call.1} parent=11 // pred_fallthru
          _
      $region12: #{tpu_custom_call.1} parent=5 // pred_fallthru
        _
      %p931 = scmp.lt.s32.totalorder %s45, 4
      // Predicated region
      $region117: #{tpu_custom_call.1} parent=5 // pred_check
        %p932 = pneg %p931
      $region118: #{tpu_custom_call.1} parent=5 // pred_check_branch
        %934 = sbr.rel (%p932) target = $region120
      $region119: #{tpu_custom_call.1} parent=5 // pred_region
        // Predicated region
        $region121: #{tpu_custom_call.1} parent=119 // pred_check
          %p935 = pneg %p81
        $region122: #{tpu_custom_call.1} parent=119 // pred_check_branch
          %937 = sbr.rel (%p935) target = $region124
        $region123: #{tpu_custom_call.1} parent=119 // pred_region
          %s938 = smul.u32 %s52, 2
          %s939 = sadd.s32 %s938, %s53
          %p940 = scmp.lt.s32.totalorder %s939, 3
          %s941 = scalar_select %p940, %s939, 3
          %s942 = smul.addr %s941, 8
          %s943 = scalar_lea.vmem %s0, %s942
          %s944 = smul.u32 %s52, 2
          %s945 = sadd.s32 %s944, %s53
        $region124: #{tpu_custom_call.1} parent=119 // pred_fallthru
          _
        // Predicated region
        $region125: #{tpu_custom_call.1} parent=119 // pred_check
          %p946 = pneg %p107
        $region126: #{tpu_custom_call.1} parent=119 // pred_check_branch
          %948 = sbr.rel (%p946) target = $region128
        $region127: #{tpu_custom_call.1} parent=119 // pred_region
          %p949 = scmp.lt.s32.totalorder %s52, 1
          %s950 = scalar_select %p949, %s52, 1
          %s951 = smul.addr %s950, 8
          %s952 = scalar_lea.vmem %s1, %s951
        $region128: #{tpu_custom_call.1} parent=119 // pred_fallthru
          _
      $region120: #{tpu_custom_call.1} parent=5 // pred_fallthru
        _
      %p953 = scmp.le.s32.totalorder 1, %s45
      %p954 = scmp.lt.s32.totalorder %s45, 5
      %p955 = pnand %p953, %p954
      %p956 = pneg %p955
      // Predicated region
      $region129: #{tpu_custom_call.1} parent=5 // pred_check
        _
      $region130: #{tpu_custom_call.1} parent=5 // pred_check_branch
        %958 = sbr.rel (%p955) target = $region132
      $region131: #{tpu_custom_call.1} parent=5 // pred_region
        %s959 = ssub.s32 %s45, 1
        // Predicated region
        $region133: #{tpu_custom_call.1} parent=131 // pred_check
          %p960 = pneg %p218
        $region134: #{tpu_custom_call.1} parent=131 // pred_check_branch
          %962 = sbr.rel (%p960) target = $region136
        $region135: #{tpu_custom_call.1} parent=131 // pred_region
          %964 = dma.done [#allocation3], 256
        $region136: #{tpu_custom_call.1} parent=131 // pred_fallthru
          _
        // Predicated region
        $region137: #{tpu_custom_call.1} parent=131 // pred_check
          %p965 = pneg %p260
        $region138: #{tpu_custom_call.1} parent=131 // pred_check_branch
          %967 = sbr.rel (%p965) target = $region140
        $region139: #{tpu_custom_call.1} parent=131 // pred_region
          %969 = dma.done [#allocation6], 256
        $region140: #{tpu_custom_call.1} parent=131 // pred_fallthru
          _
        // Predicated region
        $region141: #{tpu_custom_call.1} parent=131 // pred_check
          %p970 = pneg %p281
        $region142: #{tpu_custom_call.1} parent=131 // pred_check_branch
          %972 = sbr.rel (%p970) target = $region144
        $region143: #{tpu_custom_call.1} parent=131 // pred_region
          %974 = dma.done [#allocation6], 16
        $region144: #{tpu_custom_call.1} parent=131 // pred_fallthru
          _
        // Predicated region
        $region145: #{tpu_custom_call.1} parent=131 // pred_check
          %p975 = pneg %p302
        $region146: #{tpu_custom_call.1} parent=131 // pred_check_branch
          %977 = sbr.rel (%p975) target = $region148
        $region147: #{tpu_custom_call.1} parent=131 // pred_region
          %979 = dma.done [#allocation9], 256
        $region148: #{tpu_custom_call.1} parent=131 // pred_fallthru
          _
        // Predicated region
        $region149: #{tpu_custom_call.1} parent=131 // pred_check
          %p980 = pneg %p323
        $region150: #{tpu_custom_call.1} parent=131 // pred_check_branch
          %982 = sbr.rel (%p980) target = $region152
        $region151: #{tpu_custom_call.1} parent=131 // pred_region
          %984 = dma.done [#allocation9], 16
        $region152: #{tpu_custom_call.1} parent=131 // pred_fallthru
          _
        // Predicated region
        $region153: #{tpu_custom_call.1} parent=131 // pred_check
          %p985 = pneg %p344
        $region154: #{tpu_custom_call.1} parent=131 // pred_check_branch
          %987 = sbr.rel (%p985) target = $region156
        $region155: #{tpu_custom_call.1} parent=131 // pred_region
          %989 = dma.done [#allocation12], 256
        $region156: #{tpu_custom_call.1} parent=131 // pred_fallthru
          _
        // Predicated region
        $region157: #{tpu_custom_call.1} parent=131 // pred_check
          %p990 = pneg %p365
        $region158: #{tpu_custom_call.1} parent=131 // pred_check_branch
          %992 = sbr.rel (%p990) target = $region160
        $region159: #{tpu_custom_call.1} parent=131 // pred_region
          %994 = dma.done [#allocation12], 16
        $region160: #{tpu_custom_call.1} parent=131 // pred_fallthru
          _
        // Predicated region
        $region161: #{tpu_custom_call.1} parent=131 // pred_check
          %p995 = pneg %p386
        $region162: #{tpu_custom_call.1} parent=131 // pred_check_branch
          %997 = sbr.rel (%p995) target = $region164
        $region163: #{tpu_custom_call.1} parent=131 // pred_region
          %999 = dma.done [#allocation15], 256
        $region164: #{tpu_custom_call.1} parent=131 // pred_fallthru
          _
        // Predicated region
        $region165: #{tpu_custom_call.1} parent=131 // pred_check
          %p1000 = pneg %p407
        $region166: #{tpu_custom_call.1} parent=131 // pred_check_branch
          %1002 = sbr.rel (%p1000) target = $region168
        $region167: #{tpu_custom_call.1} parent=131 // pred_region
          %1004 = dma.done [#allocation15], 16
        $region168: #{tpu_custom_call.1} parent=131 // pred_fallthru
          _
        // Predicated region
        $region169: #{tpu_custom_call.1} parent=131 // pred_check
          %p1005 = pneg %p428
        $region170: #{tpu_custom_call.1} parent=131 // pred_check_branch
          %1007 = sbr.rel (%p1005) target = $region172
        $region171: #{tpu_custom_call.1} parent=131 // pred_region
          %1009 = dma.done [#allocation18], 256
        $region172: #{tpu_custom_call.1} parent=131 // pred_fallthru
          _
        // Predicated region
        $region173: #{tpu_custom_call.1} parent=131 // pred_check
          %p1010 = pneg %p449
        $region174: #{tpu_custom_call.1} parent=131 // pred_check_branch
          %1012 = sbr.rel (%p1010) target = $region176
        $region175: #{tpu_custom_call.1} parent=131 // pred_region
          %1014 = dma.done [#allocation18], 16
        $region176: #{tpu_custom_call.1} parent=131 // pred_fallthru
          _
        // Predicated region
        $region177: #{tpu_custom_call.1} parent=131 // pred_check
          %p1015 = pneg %p470
        $region178: #{tpu_custom_call.1} parent=131 // pred_check_branch
          %1017 = sbr.rel (%p1015) target = $region180
        $region179: #{tpu_custom_call.1} parent=131 // pred_region
          %1019 = dma.done [#allocation21], 256
        $region180: #{tpu_custom_call.1} parent=131 // pred_fallthru
          _
        // Predicated region
        $region181: #{tpu_custom_call.1} parent=131 // pred_check
          %p1020 = pneg %p491
        $region182: #{tpu_custom_call.1} parent=131 // pred_check_branch
          %1022 = sbr.rel (%p1020) target = $region184
        $region183: #{tpu_custom_call.1} parent=131 // pred_region
          %1024 = dma.done [#allocation21], 16
        $region184: #{tpu_custom_call.1} parent=131 // pred_fallthru
          _
        // Predicated region
        $region185: #{tpu_custom_call.1} parent=131 // pred_check
          %p1025 = pneg %p533
        $region186: #{tpu_custom_call.1} parent=131 // pred_check_branch
          %1027 = sbr.rel (%p1025) target = $region188
        $region187: #{tpu_custom_call.1} parent=131 // pred_region
          %1029 = dma.done [#allocation24], 16
        $region188: #{tpu_custom_call.1} parent=131 // pred_fallthru
          _
        // Predicated region
        $region189: #{tpu_custom_call.1} parent=131 // pred_check
          %p1030 = pneg %p659
        $region190: #{tpu_custom_call.1} parent=131 // pred_check_branch
          %1032 = sbr.rel (%p1030) target = $region192
        $region191: #{tpu_custom_call.1} parent=131 // pred_region
          %1034 = dma.done [#allocation24], 16
        $region192: #{tpu_custom_call.1} parent=131 // pred_fallthru
          _
        %s1035 = smul.u32 %s54, 2
        %s1036 = sadd.s32 %s1035, %s55
        %p1037 = scmp.lt.s32.totalorder %s1036, 3
        %s1038 = scalar_select %p1037, %s1036, 3
        %s1039 = smul.addr %s1038, 8
        %s1040 = scalar_lea.vmem %s0, %s1039
        %p1041 = pneg %p87
        %p1042 = pneg %p84
        %p1043 = scmp.lt.s32.totalorder %s54, 1
        %s1044 = scalar_select %p1043, %s54, 1
        %s1045 = smul.addr %s1044, 8
        %s1046 = scalar_lea.vmem %s1, %s1045
        %p1047 = pneg %p113
        %p1048 = pneg %p110
        %p1049 = pneg %p134
        %p1050 = pneg %p131
        %p1051 = pneg %p155
        %p1052 = pneg %p152
        %p1053 = pneg %p176
        %p1054 = pneg %p173
        %p1055 = pneg %p197
        %p1056 = pneg %p194
        %p1057 = pneg %p218
        %p1058 = pneg %p215
        %p1059 = pneg %p239
        %p1060 = pneg %p236
        %p1061 = pneg %p260
        %p1062 = pneg %p257
        %p1063 = pneg %p281
        %p1064 = pneg %p278
        %p1065 = pneg %p302
        %p1066 = pneg %p299
        %p1067 = pneg %p323
        %p1068 = pneg %p320
        %p1069 = pneg %p344
        %p1070 = pneg %p341
        %p1071 = pneg %p365
        %p1072 = pneg %p362
        %p1073 = pneg %p386
        %p1074 = pneg %p383
        %p1075 = pneg %p407
        %p1076 = pneg %p404
        %p1077 = pneg %p428
        %p1078 = pneg %p425
        %p1079 = pneg %p449
        %p1080 = pneg %p446
        %p1081 = pneg %p470
        %p1082 = pneg %p467
        %p1083 = pneg %p491
        %p1084 = pneg %p488
        %p1085 = pneg %p512
        %p1086 = pneg %p509
        %p1087 = pneg %p533
        %p1088 = pneg %p530
        %p1089 = pneg %p554
        %p1090 = pneg %p551
        %p1091 = pneg %p575
        %p1092 = pneg %p572
        %p1093 = pneg %p596
        %p1094 = pneg %p593
        %p1095 = pneg %p617
        %p1096 = pneg %p614
        %p1097 = pneg %p638
        %p1098 = pneg %p635
        %p1099 = pneg %p659
        %p1100 = pneg %p656
        %p1101 = pneg %p689
        %p1102 = pneg %p686
        %s1103 = sand.u32 %s676, 1
        %s1104 = scalar_lea.sflag [#allocation4], %s1103
        %s1105 = sand.u32 %s676, 1
        %s1106 = smul.addr %s1105, 8
        %s1107 = scalar_lea.vmem [#allocation26], %s1106
        %s1108 = smul.u32 %s54, 2
        %s1109 = sadd.s32 %s1108, %s55
        %p1110 = scmp.lt.s32.totalorder %s1109, 3
        %s1111 = scalar_select %p1110, %s1109, 3
        %s1112 = smul.addr %s1111, 8
        %s1113 = scalar_lea.vmem %s0, %s1112
        %s1114 = smul.u32 %s54, 2
        %s1115 = sadd.s32 %s1114, %s55
        %p1116 = scmp.lt.s32.totalorder %s54, 1
        %s1117 = scalar_select %p1116, %s54, 1
        %s1118 = smul.addr %s1117, 8
        %s1119 = scalar_lea.vmem %s1, %s1118
        %s1120 = smul.u32 %s54, 2
        %s1121 = sadd.s32 %s1120, %s55
        %v1123 = vld [vmem:[%s1113] sm:$0xff]
        %v1124 = vpack.c.bf16 %v1123, %v1123
        %v1125 = vld [vmem:[%s2] sm:$0xf]
        %v1126 = vld [vmem:[%s2 + $0x4] sm:$0xf]
        %v1127 = vld [vmem:[%s2 + $0x8] sm:$0xf]
        %v1128 = vld [vmem:[%s2 + $0xc] sm:$0xf]
        %v1129 = vld [vmem:[%s3] sm:$0x1]
        %v1131 = vperm.slane %v1129, 0
        %v1137 = vunpack.c.l.b16 %v1125
        %v1138 = vunpack.c.l.b16 %v1126
        %v1139 = vunpack.c.l.b16 %v1127
        %v1140 = vunpack.c.l.b16 %v1128
        %v1141 = vpack.c.b16 %v1138, %v1137
        %v1142 = vpack.c.b16 %v1140, %v1139
        %vm1145 = vcmask 261120
        %v1147 = vsel %vm1145, %v1124, 0
        %1149 = vmatpush.bf16.msra.mxu0 0
        %1150 = vmatpush.bf16.msra.mxu0 0
        %1151 = vmatpush.bf16.msra.mxu0 0
        %1152 = vmatpush.bf16.msra.mxu0 0
        %1153 = vmatpush.bf16.msra.mxu0 0
        %1154 = vmatpush.bf16.msra.mxu0 0
        %1155 = vmatpush.bf16.msra.mxu0 %v1142
        %1156 = vmatpush.bf16.msra.mxu0 %v1141
        %1157 = vmatmul.bf16.gmra.mxu0 %v1147
        %v1158 = vpop.f32.mrf.mxu0
        %v1159 = vadd.f32 %v1131, %v1158
        %v1160 = vpop.f32.mrf.mxu0
        %1161 = vdwg.mxu0
        %v1162 = vpack.c.bf16 %v1159, %v1159
        %v1163 = vld [vmem:[%s4] sm:$0xf]
        %v1164 = vld [vmem:[%s4 + $0x4] sm:$0xf]
        %v1165 = vld [vmem:[%s4 + $0x8] sm:$0xf]
        %v1166 = vld [vmem:[%s4 + $0xc] sm:$0xf]
        %v1167 = vld [vmem:[%s5] sm:$0x1]
        %v1169 = vperm.slane %v1167, 0
        %v1175 = vunpack.c.l.b16 %v1163
        %v1176 = vunpack.c.l.b16 %v1164
        %v1177 = vunpack.c.l.b16 %v1165
        %v1178 = vunpack.c.l.b16 %v1166
        %v1179 = vpack.c.b16 %v1176, %v1175
        %v1180 = vpack.c.b16 %v1178, %v1177
        %1183 = vmatpush.bf16.msra.mxu0 0
        %1184 = vmatpush.bf16.msra.mxu0 0
        %1185 = vmatpush.bf16.msra.mxu0 0
        %1186 = vmatpush.bf16.msra.mxu0 0
        %1187 = vmatpush.bf16.msra.mxu0 0
        %1188 = vmatpush.bf16.msra.mxu0 0
        %1189 = vmatpush.bf16.msra.mxu0 %v1180
        %1190 = vmatpush.bf16.msra.mxu0 %v1179
        %1191 = vmatmul.bf16.gmra.mxu0 %v1147
        %v1192 = vpop.f32.mrf.mxu0
        %v1193 = vadd.f32 %v1169, %v1192
        %v1194 = vpop.f32.mrf.mxu0
        %1195 = vdwg.mxu0
        %v1196 = vpack.c.bf16 %v1193, %v1193
        %v1197 = vld [vmem:[#allocation2] sm:$0xf]
        %v1198 = vld [vmem:[#allocation2 + $0x4] sm:$0xf]
        %v1199 = vld [vmem:[#allocation2 + $0x8] sm:$0xf]
        %v1200 = vld [vmem:[#allocation2 + $0xc] sm:$0xf]
        %v1201 = vld [vmem:[%s7] sm:$0x1]
        %v1203 = vperm.slane %v1201, 0
        %v1209 = vunpack.c.l.b16 %v1197
        %v1210 = vunpack.c.l.b16 %v1198
        %v1211 = vunpack.c.l.b16 %v1199
        %v1212 = vunpack.c.l.b16 %v1200
        %v1213 = vpack.c.b16 %v1210, %v1209
        %v1214 = vpack.c.b16 %v1212, %v1211
        %1217 = vmatpush.bf16.msra.mxu0 0
        %1218 = vmatpush.bf16.msra.mxu0 0
        %1219 = vmatpush.bf16.msra.mxu0 0
        %1220 = vmatpush.bf16.msra.mxu0 0
        %1221 = vmatpush.bf16.msra.mxu0 0
        %1222 = vmatpush.bf16.msra.mxu0 0
        %1223 = vmatpush.bf16.msra.mxu0 %v1214
        %1224 = vmatpush.bf16.msra.mxu0 %v1213
        %1225 = vmatmul.bf16.gmra.mxu0 %v1147
        %v1226 = vpop.f32.mrf.mxu0
        %v1227 = vadd.f32 %v1203, %v1226
        %v1228 = vpop.f32.mrf.mxu0
        %1229 = vdwg.mxu0
        %v1230 = vpack.c.bf16 %v1227, %v1227
        %1232 = vrot.lane.b32.xlu0 %v1162, 120
        %v1233 = vpop.permute.xlu0 %1232
        %1234 = vrot.lane.b32.xlu0 %v1162, 112
        %v1235 = vpop.permute.xlu0 %1234
        %1236 = vrot.lane.b32.xlu0 %v1162, 104
        %v1237 = vpop.permute.xlu0 %1236
        %1239 = vrot.lane.b32.xlu0 %v1196, 120
        %v1240 = vpop.permute.xlu0 %1239
        %1241 = vrot.lane.b32.xlu0 %v1196, 112
        %v1242 = vpop.permute.xlu0 %1241
        %1243 = vrot.lane.b32.xlu0 %v1196, 104
        %v1244 = vpop.permute.xlu0 %1243
        %1246 = vrot.lane.b32.xlu0 %v1230, 120
        %v1247 = vpop.permute.xlu0 %1246
        %1248 = vrot.lane.b32.xlu0 %v1230, 112
        %v1249 = vpop.permute.xlu0 %1248
        %1250 = vrot.lane.b32.xlu0 %v1230, 104
        %v1251 = vpop.permute.xlu0 %1250
        %vm1252 = vcmask 64512
        %v1254 = vsel %vm1252, %v1162, 0
        %v1257 = vsel %vm1252, %v1196, 0
        %1259 = vmatpush.bf16.xpose.msra.mxu0 0
        %1260 = vmatpush.bf16.xpose.msra.mxu0 0
        %1261 = vmatpush.bf16.xpose.msra.mxu0 0
        %1262 = vmatpush.bf16.xpose.msra.mxu0 0
        %1263 = vmatpush.bf16.xpose.msra.mxu0 0
        %1264 = vmatpush.bf16.xpose.msra.mxu0 0
        %1265 = vmatpush.bf16.xpose.msra.mxu0 0
        %1266 = vmatpush.bf16.xpose.msra.mxu0 %v1257
        %1267 = vmatmul.bf16.gmra.mxu0 %v1254
        %v1268 = vpop.f32.mrf.mxu0
        %v1269 = vadd.f32 0.0, %v1268
        %v1270 = vpop.f32.mrf.mxu0
        %1271 = vdwg.mxu0
        %v1273 = vsel %vm1252, %v1233, 0
        %v1276 = vsel %vm1252, %v1240, 0
        %1278 = vmatpush.bf16.xpose.msra.mxu0 0
        %1279 = vmatpush.bf16.xpose.msra.mxu0 0
        %1280 = vmatpush.bf16.xpose.msra.mxu0 0
        %1281 = vmatpush.bf16.xpose.msra.mxu0 0
        %1282 = vmatpush.bf16.xpose.msra.mxu0 0
        %1283 = vmatpush.bf16.xpose.msra.mxu0 0
        %1284 = vmatpush.bf16.xpose.msra.mxu0 0
        %1285 = vmatpush.bf16.xpose.msra.mxu0 %v1276
        %1286 = vmatmul.bf16.gmra.mxu0 %v1273
        %v1287 = vpop.f32.mrf.mxu0
        %v1288 = vadd.f32 0.0, %v1287
        %v1289 = vpop.f32.mrf.mxu0
        %1290 = vdwg.mxu0
        %v1292 = vsel %vm1252, %v1235, 0
        %v1295 = vsel %vm1252, %v1242, 0
        %1297 = vmatpush.bf16.xpose.msra.mxu0 0
        %1298 = vmatpush.bf16.xpose.msra.mxu0 0
        %1299 = vmatpush.bf16.xpose.msra.mxu0 0
        %1300 = vmatpush.bf16.xpose.msra.mxu0 0
        %1301 = vmatpush.bf16.xpose.msra.mxu0 0
        %1302 = vmatpush.bf16.xpose.msra.mxu0 0
        %1303 = vmatpush.bf16.xpose.msra.mxu0 0
        %1304 = vmatpush.bf16.xpose.msra.mxu0 %v1295
        %1305 = vmatmul.bf16.gmra.mxu0 %v1292
        %v1306 = vpop.f32.mrf.mxu0
        %v1307 = vadd.f32 0.0, %v1306
        %v1308 = vpop.f32.mrf.mxu0
        %1309 = vdwg.mxu0
        %v1311 = vsel %vm1252, %v1237, 0
        %v1314 = vsel %vm1252, %v1244, 0
        %1316 = vmatpush.bf16.xpose.msra.mxu0 0
        %1317 = vmatpush.bf16.xpose.msra.mxu0 0
        %1318 = vmatpush.bf16.xpose.msra.mxu0 0
        %1319 = vmatpush.bf16.xpose.msra.mxu0 0
        %1320 = vmatpush.bf16.xpose.msra.mxu0 0
        %1321 = vmatpush.bf16.xpose.msra.mxu0 0
        %1322 = vmatpush.bf16.xpose.msra.mxu0 0
        %1323 = vmatpush.bf16.xpose.msra.mxu0 %v1314
        %1324 = vmatmul.bf16.gmra.mxu0 %v1311
        %v1325 = vpop.f32.mrf.mxu0
        %v1326 = vadd.f32 0.0, %v1325
        %v1327 = vpop.f32.mrf.mxu0
        %1328 = vdwg.mxu0
        %v1329 = vsel %vm1252, %v1269, -inf
        %1330 = vmax.xlane.f32.xlu0 %v1329
        %v1331 = vpop.xlane.xlu0 %1330
        %v1332 = vsel %vm1252, %v1288, -inf
        %1333 = vmax.xlane.f32.xlu0 %v1332
        %v1334 = vpop.xlane.xlu0 %1333
        %v1335 = vsel %vm1252, %v1307, -inf
        %1336 = vmax.xlane.f32.xlu0 %v1335
        %v1337 = vpop.xlane.xlu0 %1336
        %v1338 = vsel %vm1252, %v1326, -inf
        %1339 = vmax.xlane.f32.xlu0 %v1338
        %v1340 = vpop.xlane.xlu0 %1339
        %v1341 = vsub.f32 %v1269, %v1331
        %v1342 = vsub.f32 %v1288, %v1334
        %v1343 = vsub.f32 %v1307, %v1337
        %v1344 = vsub.f32 %v1326, %v1340
        %v1345 = vmul.f32 %v1341, 1.442695
        %v1346 = vpow.pop %v1345
        %v1347 = vmul.f32 %v1342, 1.442695
        %v1348 = vpow.pop %v1347
        %v1349 = vmul.f32 %v1343, 1.442695
        %v1350 = vpow.pop %v1349
        %v1351 = vmul.f32 %v1344, 1.442695
        %v1352 = vpow.pop %v1351
        %v1353 = vsel %vm1252, %v1346, 0.0
        %1354 = vadd.xlane.f32.xlu0 %v1353
        %v1355 = vpop.xlane.xlu0 %1354
        %v1356 = vsel %vm1252, %v1348, 0.0
        %1357 = vadd.xlane.f32.xlu0 %v1356
        %v1358 = vpop.xlane.xlu0 %1357
        %v1359 = vsel %vm1252, %v1350, 0.0
        %1360 = vadd.xlane.f32.xlu0 %v1359
        %v1361 = vpop.xlane.xlu0 %1360
        %v1362 = vsel %vm1252, %v1352, 0.0
        %1363 = vadd.xlane.f32.xlu0 %v1362
        %v1364 = vpop.xlane.xlu0 %1363
        %v1365 = vrcp.pop %v1355
        %v1366 = vrcp.pop %v1358
        %v1367 = vrcp.pop %v1361
        %v1368 = vrcp.pop %v1364
        %v1369 = vmul.f32 %v1346, %v1365
        %v1370 = vmul.f32 %v1348, %v1366
        %v1371 = vmul.f32 %v1350, %v1367
        %v1372 = vmul.f32 %v1352, %v1368
        %v1373 = vpack.c.bf16 %v1369, %v1369
        %v1374 = vpack.c.bf16 %v1370, %v1370
        %v1375 = vpack.c.bf16 %v1371, %v1371
        %v1376 = vpack.c.bf16 %v1372, %v1372
        %v1378 = vsel %vm1252, %v1373, 0
        %vm1380 = vcmask 1043456
        %v1382 = vsel %vm1380, %v1230, 0
        %1384 = vmatpush.bf16.msra.mxu0 0
        %1385 = vmatpush.bf16.msra.mxu0 0
        %1386 = vmatpush.bf16.msra.mxu0 0
        %1387 = vmatpush.bf16.msra.mxu0 0
        %1388 = vmatpush.bf16.msra.mxu0 0
        %1389 = vmatpush.bf16.msra.mxu0 0
        %1390 = vmatpush.bf16.msra.mxu0 0
        %1391 = vmatpush.bf16.msra.mxu0 %v1382
        %1392 = vmatmul.bf16.gmra.mxu0 %v1378
        %v1393 = vpop.f32.mrf.mxu0
        %v1394 = vadd.f32 0.0, %v1393
        %v1395 = vpop.f32.mrf.mxu0
        %1396 = vdwg.mxu0
        %v1398 = vsel %vm1252, %v1374, 0
        %v1401 = vsel %vm1380, %v1247, 0
        %1403 = vmatpush.bf16.msra.mxu0 0
        %1404 = vmatpush.bf16.msra.mxu0 0
        %1405 = vmatpush.bf16.msra.mxu0 0
        %1406 = vmatpush.bf16.msra.mxu0 0
        %1407 = vmatpush.bf16.msra.mxu0 0
        %1408 = vmatpush.bf16.msra.mxu0 0
        %1409 = vmatpush.bf16.msra.mxu0 0
        %1410 = vmatpush.bf16.msra.mxu0 %v1401
        %1411 = vmatmul.bf16.gmra.mxu0 %v1398
        %v1412 = vpop.f32.mrf.mxu0
        %v1413 = vadd.f32 0.0, %v1412
        %v1414 = vpop.f32.mrf.mxu0
        %1415 = vdwg.mxu0
        %v1417 = vsel %vm1252, %v1375, 0
        %v1420 = vsel %vm1380, %v1249, 0
        %1422 = vmatpush.bf16.msra.mxu0 0
        %1423 = vmatpush.bf16.msra.mxu0 0
        %1424 = vmatpush.bf16.msra.mxu0 0
        %1425 = vmatpush.bf16.msra.mxu0 0
        %1426 = vmatpush.bf16.msra.mxu0 0
        %1427 = vmatpush.bf16.msra.mxu0 0
        %1428 = vmatpush.bf16.msra.mxu0 0
        %1429 = vmatpush.bf16.msra.mxu0 %v1420
        %1430 = vmatmul.bf16.gmra.mxu0 %v1417
        %v1431 = vpop.f32.mrf.mxu0
        %v1432 = vadd.f32 0.0, %v1431
        %v1433 = vpop.f32.mrf.mxu0
        %1434 = vdwg.mxu0
        %v1436 = vsel %vm1252, %v1376, 0
        %v1439 = vsel %vm1380, %v1251, 0
        %1441 = vmatpush.bf16.msra.mxu0 0
        %1442 = vmatpush.bf16.msra.mxu0 0
        %1443 = vmatpush.bf16.msra.mxu0 0
        %1444 = vmatpush.bf16.msra.mxu0 0
        %1445 = vmatpush.bf16.msra.mxu0 0
        %1446 = vmatpush.bf16.msra.mxu0 0
        %1447 = vmatpush.bf16.msra.mxu0 0
        %1448 = vmatpush.bf16.msra.mxu0 %v1439
        %1449 = vmatmul.bf16.gmra.mxu0 %v1436
        %v1450 = vpop.f32.mrf.mxu0
        %v1451 = vadd.f32 0.0, %v1450
        %v1452 = vpop.f32.mrf.mxu0
        %1453 = vdwg.mxu0
        %1455 = vrot.lane.b32.xlu0 %v1413, 8
        %v1456 = vpop.permute.xlu0 %1455
        %1459 = vrot.lane.b32.xlu0 %v1432, 16
        %v1460 = vpop.permute.xlu0 %1459
        %1463 = vrot.lane.b32.xlu0 %v1451, 24
        %v1464 = vpop.permute.xlu0 %1463
        %v1466 = vsel %vm1252, %v1394, %v1456
        %vm1467 = vcmask 130048
        %v1468 = vsel %vm1467, %v1466, %v1460
        %vm1469 = vcmask 195584
        %v1470 = vsel %vm1469, %v1468, %v1464
        %v1471 = vpack.c.bf16 %v1470, %v1470
        %v1472 = vld [vmem:[#allocation5] sm:$0xf]
        %v1473 = vld [vmem:[#allocation5 + $0x4] sm:$0xf]
        %v1474 = vld [vmem:[#allocation5 + $0x8] sm:$0xf]
        %v1475 = vld [vmem:[#allocation5 + $0xc] sm:$0xf]
        %v1476 = vld [vmem:[#allocation7] sm:$0x1]
        %v1478 = vperm.slane %v1476, 0
        %v1484 = vunpack.c.l.b16 %v1472
        %v1485 = vunpack.c.l.b16 %v1473
        %v1486 = vunpack.c.l.b16 %v1474
        %v1487 = vunpack.c.l.b16 %v1475
        %v1488 = vpack.c.b16 %v1485, %v1484
        %v1489 = vpack.c.b16 %v1487, %v1486
        %v1493 = vsel %vm1145, %v1471, 0
        %1495 = vmatpush.bf16.msra.mxu0 0
        %1496 = vmatpush.bf16.msra.mxu0 0
        %1497 = vmatpush.bf16.msra.mxu0 0
        %1498 = vmatpush.bf16.msra.mxu0 0
        %1499 = vmatpush.bf16.msra.mxu0 0
        %1500 = vmatpush.bf16.msra.mxu0 0
        %1501 = vmatpush.bf16.msra.mxu0 %v1489
        %1502 = vmatpush.bf16.msra.mxu0 %v1488
        %1503 = vmatmul.bf16.gmra.mxu0 %v1493
        %v1504 = vpop.f32.mrf.mxu0
        %v1505 = vadd.f32 %v1478, %v1504
        %v1506 = vpop.f32.mrf.mxu0
        %1507 = vdwg.mxu0
        %v1508 = vadd.f32 %v1123, %v1505
        %v1509 = vld [vmem:[%s22] sm:$0x1]
        %v1510 = vld [vmem:[%s23] sm:$0x1]
        %v1511 = vsel %vm1145, %v1508, 0.0
        %1512 = vadd.xlane.f32.xlu0 %v1511
        %v1513 = vpop.xlane.xlu0 %1512
        %v1514 = vrcp.pop 32.0
        %v1515 = vmul.f32 32.0, %v1514
        %v1516 = vsub.f32 1.0, %v1515
        %v1517 = vmul.f32 %v1514, %v1516
        %v1518 = vadd.f32 %v1514, %v1517
        %vm1519 = vweird.f32 %v1514
        %v1520 = vsel %vm1519, %v1514, %v1518
        %v1521 = vmul.f32 %v1513, %v1520
        %v1522 = vsub.f32 %v1508, %v1521
        %v1523 = vmul.f32 %v1522, %v1522
        %v1524 = vsel %vm1145, %v1523, 0.0
        %1525 = vadd.xlane.f32.xlu0 %v1524
        %v1526 = vpop.xlane.xlu0 %1525
        %v1527 = vmul.f32 %v1526, %v1520
        %v1528 = vadd.f32 %v1527, 1e-05
        %v1529 = vrsqrt.pop %v1528
        %v1530 = vmul.f32 %v1529, %v1528
        %v1531 = vmul.f32 %v1530, %v1529
        %v1532 = vmul.f32 0.5, %v1531
        %v1533 = vsub.f32 1.5, %v1532
        %v1534 = vmul.f32 %v1529, %v1533
        %vm1535 = vweird.f32 %v1528
        %vm1536 = vweird.f32 %v1529
        %vm1537 = vmor %vm1535, %vm1536
        %v1538 = vsel %vm1537, %v1529, %v1534
        %v1539 = vmul.f32 %v1522, %v1538
        %v1541 = vperm.slane %v1509, 0
        %v1543 = vmul.f32 %v1539, %v1541
        %v1545 = vperm.slane %v1510, 0
        %v1547 = vadd.f32 %v1543, %v1545
        %v1548 = vld [vmem:[%s1119] sm:$0xff]
        %v1549 = vpack.c.bf16 %v1548, %v1548
        %v1550 = vpack.c.bf16 %v1547, %v1547
        %v1551 = vld [vmem:[#allocation8] sm:$0xf]
        %v1552 = vld [vmem:[#allocation8 + $0x4] sm:$0xf]
        %v1553 = vld [vmem:[#allocation8 + $0x8] sm:$0xf]
        %v1554 = vld [vmem:[#allocation8 + $0xc] sm:$0xf]
        %v1555 = vld [vmem:[#allocation10] sm:$0x1]
        %v1557 = vshrl.u32 %v1550, 16
        %v1559 = vrot.slane %v1557, 3
        %v1564 = vunpack.c.l.b16 %v1551
        %v1565 = vunpack.c.l.b16 %v1552
        %v1566 = vunpack.c.l.b16 %v1553
        %v1567 = vunpack.c.l.b16 %v1554
        %v1568 = vpack.c.b16 %v1565, %v1564
        %v1569 = vpack.c.b16 %v1567, %v1566
        %v1573 = vsel %vm1145, %v1559, 0
        %1575 = vmatpush.bf16.msra.mxu0 0
        %1576 = vmatpush.bf16.msra.mxu0 0
        %1577 = vmatpush.bf16.msra.mxu0 0
        %1578 = vmatpush.bf16.msra.mxu0 0
        %1579 = vmatpush.bf16.msra.mxu0 0
        %1580 = vmatpush.bf16.msra.mxu0 0
        %1581 = vmatpush.bf16.msra.mxu0 %v1569
        %1582 = vmatpush.bf16.msra.mxu0 %v1568
        %1583 = vmatmul.bf16.gmra.mxu0 %v1573
        %v1584 = vpop.f32.mrf.mxu0
        %v1585 = vadd.f32 %v1555, %v1584
        %v1586 = vpop.f32.mrf.mxu0
        %1587 = vdwg.mxu0
        %v1588 = vpack.c.bf16 %v1585, %v1585
        %v1589 = vld [vmem:[#allocation11] sm:$0xf]
        %v1590 = vld [vmem:[#allocation11 + $0x4] sm:$0xf]
        %v1591 = vld [vmem:[#allocation11 + $0x8] sm:$0xf]
        %v1592 = vld [vmem:[#allocation11 + $0xc] sm:$0xf]
        %v1593 = vld [vmem:[#allocation13] sm:$0x1]
        %v1595 = vperm.slane %v1593, 0
        %v1601 = vunpack.c.l.b16 %v1589
        %v1602 = vunpack.c.l.b16 %v1590
        %v1603 = vunpack.c.l.b16 %v1591
        %v1604 = vunpack.c.l.b16 %v1592
        %v1605 = vpack.c.b16 %v1602, %v1601
        %v1606 = vpack.c.b16 %v1604, %v1603
        %v1610 = vsel %vm1145, %v1549, 0
        %1612 = vmatpush.bf16.msra.mxu0 0
        %1613 = vmatpush.bf16.msra.mxu0 0
        %1614 = vmatpush.bf16.msra.mxu0 0
        %1615 = vmatpush.bf16.msra.mxu0 0
        %1616 = vmatpush.bf16.msra.mxu0 0
        %1617 = vmatpush.bf16.msra.mxu0 0
        %1618 = vmatpush.bf16.msra.mxu0 %v1606
        %1619 = vmatpush.bf16.msra.mxu0 %v1605
        %1620 = vmatmul.bf16.gmra.mxu0 %v1610
        %v1621 = vpop.f32.mrf.mxu0
        %v1622 = vadd.f32 %v1595, %v1621
        %v1623 = vpop.f32.mrf.mxu0
        %1624 = vdwg.mxu0
        %v1625 = vpack.c.bf16 %v1622, %v1622
        %v1626 = vld [vmem:[#allocation14] sm:$0xf]
        %v1627 = vld [vmem:[#allocation14 + $0x4] sm:$0xf]
        %v1628 = vld [vmem:[#allocation14 + $0x8] sm:$0xf]
        %v1629 = vld [vmem:[#allocation14 + $0xc] sm:$0xf]
        %v1630 = vld [vmem:[#allocation16] sm:$0x1]
        %v1632 = vperm.slane %v1630, 0
        %v1638 = vunpack.c.l.b16 %v1626
        %v1639 = vunpack.c.l.b16 %v1627
        %v1640 = vunpack.c.l.b16 %v1628
        %v1641 = vunpack.c.l.b16 %v1629
        %v1642 = vpack.c.b16 %v1639, %v1638
        %v1643 = vpack.c.b16 %v1641, %v1640
        %1646 = vmatpush.bf16.msra.mxu0 0
        %1647 = vmatpush.bf16.msra.mxu0 0
        %1648 = vmatpush.bf16.msra.mxu0 0
        %1649 = vmatpush.bf16.msra.mxu0 0
        %1650 = vmatpush.bf16.msra.mxu0 0
        %1651 = vmatpush.bf16.msra.mxu0 0
        %1652 = vmatpush.bf16.msra.mxu0 %v1643
        %1653 = vmatpush.bf16.msra.mxu0 %v1642
        %1654 = vmatmul.bf16.gmra.mxu0 %v1610
        %v1655 = vpop.f32.mrf.mxu0
        %v1656 = vadd.f32 %v1632, %v1655
        %v1657 = vpop.f32.mrf.mxu0
        %1658 = vdwg.mxu0
        %v1659 = vpack.c.bf16 %v1656, %v1656
        %1661 = vrot.lane.b32.xlu0 %v1588, 120
        %v1662 = vpop.permute.xlu0 %1661
        %1663 = vrot.lane.b32.xlu0 %v1588, 112
        %v1664 = vpop.permute.xlu0 %1663
        %1665 = vrot.lane.b32.xlu0 %v1588, 104
        %v1666 = vpop.permute.xlu0 %1665
        %1668 = vrot.lane.b32.xlu0 %v1625, 120
        %v1669 = vpop.permute.xlu0 %1668
        %1670 = vrot.lane.b32.xlu0 %v1625, 112
        %v1671 = vpop.permute.xlu0 %1670
        %1672 = vrot.lane.b32.xlu0 %v1625, 104
        %v1673 = vpop.permute.xlu0 %1672
        %v1675 = vsel %vm1252, %v1588, 0
        %v1678 = vsel %vm1252, %v1625, 0
        %1680 = vmatpush.bf16.xpose.msra.mxu0 0
        %1681 = vmatpush.bf16.xpose.msra.mxu0 0
        %1682 = vmatpush.bf16.xpose.msra.mxu0 0
        %1683 = vmatpush.bf16.xpose.msra.mxu0 0
        %1684 = vmatpush.bf16.xpose.msra.mxu0 0
        %1685 = vmatpush.bf16.xpose.msra.mxu0 0
        %1686 = vmatpush.bf16.xpose.msra.mxu0 0
        %1687 = vmatpush.bf16.xpose.msra.mxu0 %v1678
        %1688 = vmatmul.bf16.gmra.mxu0 %v1675
        %v1689 = vpop.f32.mrf.mxu0
        %v1690 = vadd.f32 0.0, %v1689
        %v1691 = vpop.f32.mrf.mxu0
        %1692 = vdwg.mxu0
        %v1694 = vsel %vm1252, %v1662, 0
        %v1697 = vsel %vm1252, %v1669, 0
        %1699 = vmatpush.bf16.xpose.msra.mxu0 0
        %1700 = vmatpush.bf16.xpose.msra.mxu0 0
        %1701 = vmatpush.bf16.xpose.msra.mxu0 0
        %1702 = vmatpush.bf16.xpose.msra.mxu0 0
        %1703 = vmatpush.bf16.xpose.msra.mxu0 0
        %1704 = vmatpush.bf16.xpose.msra.mxu0 0
        %1705 = vmatpush.bf16.xpose.msra.mxu0 0
        %1706 = vmatpush.bf16.xpose.msra.mxu0 %v1697
        %1707 = vmatmul.bf16.gmra.mxu0 %v1694
        %v1708 = vpop.f32.mrf.mxu0
        %v1709 = vadd.f32 0.0, %v1708
        %v1710 = vpop.f32.mrf.mxu0
        %1711 = vdwg.mxu0
        %v1713 = vsel %vm1252, %v1664, 0
        %v1716 = vsel %vm1252, %v1671, 0
        %1718 = vmatpush.bf16.xpose.msra.mxu0 0
        %1719 = vmatpush.bf16.xpose.msra.mxu0 0
        %1720 = vmatpush.bf16.xpose.msra.mxu0 0
        %1721 = vmatpush.bf16.xpose.msra.mxu0 0
        %1722 = vmatpush.bf16.xpose.msra.mxu0 0
        %1723 = vmatpush.bf16.xpose.msra.mxu0 0
        %1724 = vmatpush.bf16.xpose.msra.mxu0 0
        %1725 = vmatpush.bf16.xpose.msra.mxu0 %v1716
        %1726 = vmatmul.bf16.gmra.mxu0 %v1713
        %v1727 = vpop.f32.mrf.mxu0
        %v1728 = vadd.f32 0.0, %v1727
        %v1729 = vpop.f32.mrf.mxu0
        %1730 = vdwg.mxu0
        %v1732 = vsel %vm1252, %v1666, 0
        %v1735 = vsel %vm1252, %v1673, 0
        %1737 = vmatpush.bf16.xpose.msra.mxu0 0
        %1738 = vmatpush.bf16.xpose.msra.mxu0 0
        %1739 = vmatpush.bf16.xpose.msra.mxu0 0
        %1740 = vmatpush.bf16.xpose.msra.mxu0 0
        %1741 = vmatpush.bf16.xpose.msra.mxu0 0
        %1742 = vmatpush.bf16.xpose.msra.mxu0 0
        %1743 = vmatpush.bf16.xpose.msra.mxu0 0
        %1744 = vmatpush.bf16.xpose.msra.mxu0 %v1735
        %1745 = vmatmul.bf16.gmra.mxu0 %v1732
        %v1746 = vpop.f32.mrf.mxu0
        %v1747 = vadd.f32 0.0, %v1746
        %v1748 = vpop.f32.mrf.mxu0
        %1749 = vdwg.mxu0
        %vm1750 = vcmask 57344
        %v1751 = vsel %vm1750, %v1690, -inf
        %1752 = vmax.xlane.f32.xlu0 %v1751
        %v1753 = vpop.xlane.xlu0 %1752
        %v1754 = vsel %vm1750, %v1709, -inf
        %1755 = vmax.xlane.f32.xlu0 %v1754
        %v1756 = vpop.xlane.xlu0 %1755
        %v1757 = vsel %vm1750, %v1728, -inf
        %1758 = vmax.xlane.f32.xlu0 %v1757
        %v1759 = vpop.xlane.xlu0 %1758
        %v1760 = vsel %vm1750, %v1747, -inf
        %1761 = vmax.xlane.f32.xlu0 %v1760
        %v1762 = vpop.xlane.xlu0 %1761
        %v1763 = vsub.f32 %v1690, %v1753
        %v1764 = vsub.f32 %v1709, %v1756
        %v1765 = vsub.f32 %v1728, %v1759
        %v1766 = vsub.f32 %v1747, %v1762
        %v1767 = vmul.f32 %v1763, 1.442695
        %v1768 = vpow.pop %v1767
        %v1769 = vmul.f32 %v1764, 1.442695
        %v1770 = vpow.pop %v1769
        %v1771 = vmul.f32 %v1765, 1.442695
        %v1772 = vpow.pop %v1771
        %v1773 = vmul.f32 %v1766, 1.442695
        %v1774 = vpow.pop %v1773
        %v1775 = vsel %vm1750, %v1768, 0.0
        %1776 = vadd.xlane.f32.xlu0 %v1775
        %v1777 = vpop.xlane.xlu0 %1776
        %v1778 = vsel %vm1750, %v1770, 0.0
        %1779 = vadd.xlane.f32.xlu0 %v1778
        %v1780 = vpop.xlane.xlu0 %1779
        %v1781 = vsel %vm1750, %v1772, 0.0
        %1782 = vadd.xlane.f32.xlu0 %v1781
        %v1783 = vpop.xlane.xlu0 %1782
        %v1784 = vsel %vm1750, %v1774, 0.0
        %1785 = vadd.xlane.f32.xlu0 %v1784
        %v1786 = vpop.xlane.xlu0 %1785
        %v1787 = vrcp.pop %v1777
        %v1788 = vrcp.pop %v1780
        %v1789 = vrcp.pop %v1783
        %v1790 = vrcp.pop %v1786
        %v1791 = vmul.f32 %v1768, %v1787
        %v1792 = vmul.f32 %v1770, %v1788
        %v1793 = vmul.f32 %v1772, %v1789
        %v1794 = vmul.f32 %v1774, %v1790
        %v1795 = vpack.c.bf16 %v1791, %v1791
        %v1796 = vpack.c.bf16 %v1792, %v1792
        %v1797 = vpack.c.bf16 %v1793, %v1793
        %v1798 = vpack.c.bf16 %v1794, %v1794
        %1800 = vrot.lane.b32.xlu0 %v1659, 120
        %v1801 = vpop.permute.xlu0 %1800
        %1802 = vrot.lane.b32.xlu0 %v1659, 112
        %v1803 = vpop.permute.xlu0 %1802
        %1804 = vrot.lane.b32.xlu0 %v1659, 104
        %v1805 = vpop.permute.xlu0 %1804
        %v1807 = vsel %vm1252, %v1795, 0
        %v1810 = vsel %vm1380, %v1659, 0
        %1812 = vmatpush.bf16.msra.mxu0 0
        %1813 = vmatpush.bf16.msra.mxu0 0
        %1814 = vmatpush.bf16.msra.mxu0 0
        %1815 = vmatpush.bf16.msra.mxu0 0
        %1816 = vmatpush.bf16.msra.mxu0 0
        %1817 = vmatpush.bf16.msra.mxu0 0
        %1818 = vmatpush.bf16.msra.mxu0 0
        %1819 = vmatpush.bf16.msra.mxu0 %v1810
        %1820 = vmatmul.bf16.gmra.mxu0 %v1807
        %v1821 = vpop.f32.mrf.mxu0
        %v1822 = vadd.f32 0.0, %v1821
        %v1823 = vpop.f32.mrf.mxu0
        %1824 = vdwg.mxu0
        %v1826 = vsel %vm1252, %v1796, 0
        %v1829 = vsel %vm1380, %v1801, 0
        %1831 = vmatpush.bf16.msra.mxu0 0
        %1832 = vmatpush.bf16.msra.mxu0 0
        %1833 = vmatpush.bf16.msra.mxu0 0
        %1834 = vmatpush.bf16.msra.mxu0 0
        %1835 = vmatpush.bf16.msra.mxu0 0
        %1836 = vmatpush.bf16.msra.mxu0 0
        %1837 = vmatpush.bf16.msra.mxu0 0
        %1838 = vmatpush.bf16.msra.mxu0 %v1829
        %1839 = vmatmul.bf16.gmra.mxu0 %v1826
        %v1840 = vpop.f32.mrf.mxu0
        %v1841 = vadd.f32 0.0, %v1840
        %v1842 = vpop.f32.mrf.mxu0
        %1843 = vdwg.mxu0
        %v1845 = vsel %vm1252, %v1797, 0
        %v1848 = vsel %vm1380, %v1803, 0
        %1850 = vmatpush.bf16.msra.mxu0 0
        %1851 = vmatpush.bf16.msra.mxu0 0
        %1852 = vmatpush.bf16.msra.mxu0 0
        %1853 = vmatpush.bf16.msra.mxu0 0
        %1854 = vmatpush.bf16.msra.mxu0 0
        %1855 = vmatpush.bf16.msra.mxu0 0
        %1856 = vmatpush.bf16.msra.mxu0 0
        %1857 = vmatpush.bf16.msra.mxu0 %v1848
        %1858 = vmatmul.bf16.gmra.mxu0 %v1845
        %v1859 = vpop.f32.mrf.mxu0
        %v1860 = vadd.f32 0.0, %v1859
        %v1861 = vpop.f32.mrf.mxu0
        %1862 = vdwg.mxu0
        %v1864 = vsel %vm1252, %v1798, 0
        %v1867 = vsel %vm1380, %v1805, 0
        %1869 = vmatpush.bf16.msra.mxu0 0
        %1870 = vmatpush.bf16.msra.mxu0 0
        %1871 = vmatpush.bf16.msra.mxu0 0
        %1872 = vmatpush.bf16.msra.mxu0 0
        %1873 = vmatpush.bf16.msra.mxu0 0
        %1874 = vmatpush.bf16.msra.mxu0 0
        %1875 = vmatpush.bf16.msra.mxu0 0
        %1876 = vmatpush.bf16.msra.mxu0 %v1867
        %1877 = vmatmul.bf16.gmra.mxu0 %v1864
        %v1878 = vpop.f32.mrf.mxu0
        %v1879 = vadd.f32 0.0, %v1878
        %v1880 = vpop.f32.mrf.mxu0
        %1881 = vdwg.mxu0
        %1883 = vrot.lane.b32.xlu0 %v1841, 8
        %v1884 = vpop.permute.xlu0 %1883
        %1887 = vrot.lane.b32.xlu0 %v1860, 16
        %v1888 = vpop.permute.xlu0 %1887
        %1891 = vrot.lane.b32.xlu0 %v1879, 24
        %v1892 = vpop.permute.xlu0 %1891
        %v1894 = vsel %vm1252, %v1822, %v1884
        %v1895 = vsel %vm1467, %v1894, %v1888
        %v1896 = vsel %vm1469, %v1895, %v1892
        %v1897 = vpack.c.bf16 %v1896, %v1896
        %v1898 = vld [vmem:[#allocation17] sm:$0xf]
        %v1899 = vld [vmem:[#allocation17 + $0x4] sm:$0xf]
        %v1900 = vld [vmem:[#allocation17 + $0x8] sm:$0xf]
        %v1901 = vld [vmem:[#allocation17 + $0xc] sm:$0xf]
        %v1902 = vld [vmem:[#allocation19] sm:$0x1]
        %v1907 = vunpack.c.l.b16 %v1898
        %v1908 = vunpack.c.l.b16 %v1899
        %v1909 = vunpack.c.l.b16 %v1900
        %v1910 = vunpack.c.l.b16 %v1901
        %v1911 = vpack.c.b16 %v1908, %v1907
        %v1912 = vpack.c.b16 %v1910, %v1909
        %v1916 = vsel %vm1145, %v1897, 0
        %1918 = vmatpush.bf16.msra.mxu0 0
        %1919 = vmatpush.bf16.msra.mxu0 0
        %1920 = vmatpush.bf16.msra.mxu0 0
        %1921 = vmatpush.bf16.msra.mxu0 0
        %1922 = vmatpush.bf16.msra.mxu0 0
        %1923 = vmatpush.bf16.msra.mxu0 0
        %1924 = vmatpush.bf16.msra.mxu0 %v1912
        %1925 = vmatpush.bf16.msra.mxu0 %v1911
        %1926 = vmatmul.bf16.gmra.mxu0 %v1916
        %v1927 = vpop.f32.mrf.mxu0
        %v1928 = vadd.f32 %v1902, %v1927
        %v1929 = vpop.f32.mrf.mxu0
        %1930 = vdwg.mxu0
        %v1932 = vrot.slane %v1928, 1
        %v1934 = vadd.f32 %v1547, %v1932
        %v1935 = vld [vmem:[%s24] sm:$0x1]
        %v1936 = vld [vmem:[%s25] sm:$0x1]
        %vm1937 = vcmask 261127
        %v1938 = vsel %vm1937, %v1934, 0.0
        %1939 = vadd.xlane.f32.xlu0 %v1938
        %v1940 = vpop.xlane.xlu0 %1939
        %v1941 = vmul.f32 %v1940, %v1520
        %v1942 = vsub.f32 %v1934, %v1941
        %v1943 = vmul.f32 %v1942, %v1942
        %v1944 = vsel %vm1937, %v1943, 0.0
        %1945 = vadd.xlane.f32.xlu0 %v1944
        %v1946 = vpop.xlane.xlu0 %1945
        %v1947 = vmul.f32 %v1946, %v1520
        %v1948 = vadd.f32 %v1947, 1e-05
        %v1949 = vrsqrt.pop %v1948
        %v1950 = vmul.f32 %v1949, %v1948
        %v1951 = vmul.f32 %v1950, %v1949
        %v1952 = vmul.f32 0.5, %v1951
        %v1953 = vsub.f32 1.5, %v1952
        %v1954 = vmul.f32 %v1949, %v1953
        %vm1955 = vweird.f32 %v1948
        %vm1956 = vweird.f32 %v1949
        %vm1957 = vmor %vm1955, %vm1956
        %v1958 = vsel %vm1957, %v1949, %v1954
        %v1959 = vmul.f32 %v1942, %v1958
        %v1961 = vperm.slane %v1935, 0
        %v1963 = vmul.f32 %v1959, %v1961
        %v1965 = vperm.slane %v1936, 0
        %v1967 = vadd.f32 %v1963, %v1965
        %v1968 = vlaneseq
        %v1969 = vshrl.u32 %v1968, 7
        %vm1970 = vcmp.eq.s32.totalorder %v1969, 7
        %v1971 = vsel %vm1970, 1, 0
        %vm1972 = vcmp.eq.s32.totalorder %v1971, 1
        %v1973 = vperm.slane %v1967, 7
        %v1974 = vsel %vm1972, %v1973, %v1547
        %v1975 = vpack.c.bf16 %v1974, %v1974
        %v1976 = vld [vmem:[#allocation20] sm:$0xf]
        %v1977 = vld [vmem:[#allocation20 + $0x4] sm:$0xf]
        %v1978 = vld [vmem:[#allocation20 + $0x8] sm:$0xf]
        %v1979 = vld [vmem:[#allocation20 + $0xc] sm:$0xf]
        %v1980 = vld [vmem:[#allocation22] sm:$0x1]
        %v1982 = vperm.slane %v1980, 0
        %v1988 = vunpack.c.l.b16 %v1976
        %v1989 = vunpack.c.l.b16 %v1977
        %v1990 = vunpack.c.l.b16 %v1978
        %v1991 = vunpack.c.l.b16 %v1979
        %v1992 = vpack.c.b16 %v1989, %v1988
        %v1993 = vpack.c.b16 %v1991, %v1990
        %v1997 = vsel %vm1145, %v1975, 0
        %1999 = vmatpush.bf16.msra.mxu0 0
        %2000 = vmatpush.bf16.msra.mxu0 0
        %2001 = vmatpush.bf16.msra.mxu0 0
        %2002 = vmatpush.bf16.msra.mxu0 0
        %2003 = vmatpush.bf16.msra.mxu0 0
        %2004 = vmatpush.bf16.msra.mxu0 0
        %2005 = vmatpush.bf16.msra.mxu0 %v1993
        %2006 = vmatpush.bf16.msra.mxu0 %v1992
        %2007 = vmatmul.bf16.gmra.mxu0 %v1997
        %v2008 = vpop.f32.mrf.mxu0
        %v2009 = vadd.f32 %v1982, %v2008
        %v2010 = vpop.f32.mrf.mxu0
        %2011 = vdwg.mxu0
        %v2012 = vmax.f32 %v2009, 0.0
        %v2013 = vpack.c.bf16 %v2012, %v2012
        %v2014 = vld [vmem:[%s20] sm:$0xf]
        %v2015 = vld [vmem:[%s20 + $0x4] sm:$0xf]
        %v2016 = vld [vmem:[%s20 + $0x8] sm:$0xf]
        %v2017 = vld [vmem:[%s20 + $0xc] sm:$0xf]
        %v2018 = vld [vmem:[%s20 + $0x10] sm:$0xf]
        %v2019 = vld [vmem:[%s20 + $0x14] sm:$0xf]
        %v2020 = vld [vmem:[%s20 + $0x18] sm:$0xf]
        %v2021 = vld [vmem:[%s20 + $0x1c] sm:$0xf]
        %v2022 = vld [vmem:[%s20 + $0x20] sm:$0xf]
        %v2023 = vld [vmem:[%s20 + $0x24] sm:$0xf]
        %v2024 = vld [vmem:[%s20 + $0x28] sm:$0xf]
        %v2025 = vld [vmem:[%s20 + $0x2c] sm:$0xf]
        %v2026 = vld [vmem:[%s20 + $0x30] sm:$0xf]
        %v2027 = vld [vmem:[%s20 + $0x34] sm:$0xf]
        %v2028 = vld [vmem:[%s20 + $0x38] sm:$0xf]
        %v2029 = vld [vmem:[%s20 + $0x3c] sm:$0xf]
        %v2030 = vld [vmem:[#allocation23] sm:$0x1]
        %v2032 = vperm.slane %v2030, 0
        %v2050 = vunpack.c.l.b16 %v2014
        %v2051 = vunpack.c.l.b16 %v2015
        %v2052 = vunpack.c.l.b16 %v2016
        %v2053 = vunpack.c.l.b16 %v2017
        %v2054 = vunpack.c.l.b16 %v2018
        %v2055 = vunpack.c.l.b16 %v2019
        %v2056 = vunpack.c.l.b16 %v2020
        %v2057 = vunpack.c.l.b16 %v2021
        %v2058 = vunpack.c.l.b16 %v2022
        %v2059 = vunpack.c.l.b16 %v2023
        %v2060 = vunpack.c.l.b16 %v2024
        %v2061 = vunpack.c.l.b16 %v2025
        %v2062 = vunpack.c.l.b16 %v2026
        %v2063 = vunpack.c.l.b16 %v2027
        %v2064 = vunpack.c.l.b16 %v2028
        %v2065 = vunpack.c.l.b16 %v2029
        %v2066 = vpack.c.b16 %v2051, %v2050
        %v2067 = vpack.c.b16 %v2053, %v2052
        %v2068 = vpack.c.b16 %v2055, %v2054
        %v2069 = vpack.c.b16 %v2057, %v2056
        %v2070 = vpack.c.b16 %v2059, %v2058
        %v2071 = vpack.c.b16 %v2061, %v2060
        %v2072 = vpack.c.b16 %v2063, %v2062
        %v2073 = vpack.c.b16 %v2065, %v2064
        %2082 = vmatpush.bf16.msra.mxu0 %v2073
        %2083 = vmatpush.bf16.msra.mxu0 %v2072
        %2084 = vmatpush.bf16.msra.mxu0 %v2071
        %2085 = vmatpush.bf16.msra.mxu0 %v2070
        %2086 = vmatpush.bf16.msra.mxu0 %v2069
        %2087 = vmatpush.bf16.msra.mxu0 %v2068
        %2088 = vmatpush.bf16.msra.mxu0 %v2067
        %2089 = vmatpush.bf16.msra.mxu0 %v2066
        %2090 = vmatmul.bf16.gmra.mxu0 %v2013
        %v2091 = vpop.f32.mrf.mxu0
        %v2092 = vadd.f32 %v2032, %v2091
        %v2093 = vpop.f32.mrf.mxu0
        %2094 = vdwg.mxu0
        %v2095 = vadd.f32 %v1974, %v2092
        %v2096 = vld [vmem:[%s26] sm:$0x1]
        %v2097 = vld [vmem:[#allocation25] sm:$0x1]
        %v2098 = vsel %vm1145, %v2095, 0.0
        %2099 = vadd.xlane.f32.xlu0 %v2098
        %v2100 = vpop.xlane.xlu0 %2099
        %v2101 = vmul.f32 %v2100, %v1520
        %v2102 = vsub.f32 %v2095, %v2101
        %v2103 = vmul.f32 %v2102, %v2102
        %v2104 = vsel %vm1145, %v2103, 0.0
        %2105 = vadd.xlane.f32.xlu0 %v2104
        %v2106 = vpop.xlane.xlu0 %2105
        %v2107 = vmul.f32 %v2106, %v1520
        %v2108 = vadd.f32 %v2107, 1e-05
        %v2109 = vrsqrt.pop %v2108
        %v2110 = vmul.f32 %v2109, %v2108
        %v2111 = vmul.f32 %v2110, %v2109
        %v2112 = vmul.f32 0.5, %v2111
        %v2113 = vsub.f32 1.5, %v2112
        %v2114 = vmul.f32 %v2109, %v2113
        %vm2115 = vweird.f32 %v2108
        %vm2116 = vweird.f32 %v2109
        %vm2117 = vmor %vm2115, %vm2116
        %v2118 = vsel %vm2117, %v2109, %v2114
        %v2119 = vmul.f32 %v2102, %v2118
        %v2121 = vperm.slane %v2096, 0
        %v2123 = vmul.f32 %v2119, %v2121
        %v2125 = vperm.slane %v2097, 0
        %v2127 = vadd.f32 %v2123, %v2125
        %2128 = vst.msk [vmem:[%s1107] sm:$0xff] %vm1145, %v2127
        %s2129 = sand.u32 %s676, 1
        %s2130 = scalar_lea.sflag [#allocation4], %s2129
        %s2131 = sand.u32 %s676, 1
        %s2132 = smul.addr %s2131, 8
        %s2133 = scalar_lea.vmem [#allocation26], %s2132
        // Predicated region
        $region193: #{tpu_custom_call.1} parent=131 // pred_check
          %p2134 = pneg %p686
        $region194: #{tpu_custom_call.1} parent=131 // pred_check_branch
          %2136 = sbr.rel (%p2134) target = $region196
        $region195: #{tpu_custom_call.1} parent=131 // pred_region
          %s2137 = smul.u32 %s54, 2
          %s2138 = sadd.s32 %s2137, %s55
          %2140 = vsyncadd %s2130, 0
          %s2141 = smul.addr %s2138, 8
          %s2142 = scalar_lea.hbm %s28, %s2141
          %s2144 = sshll.u32 %s2133, 4
          %s2145 = int_to_ptr.vmem [resolvable:$true] %s2144
          %s2146 = sshll.u32 %s2142, 4
          %s2147 = int_to_ptr.hbm [resolvable:$true] %s2146
          %2149 = dma.vmem_to_hbm [thread:$0]  %s2145, 128, %s2147, %s2130
        $region196: #{tpu_custom_call.1} parent=131 // pred_fallthru
          _
      $region132: #{tpu_custom_call.1} parent=5 // pred_fallthru
        _
      %p2150 = scmp.le.s32.totalorder 2, %s45
      // Predicated region
      $region197: #{tpu_custom_call.1} parent=5 // pred_check
        %p2151 = pneg %p2150
      $region198: #{tpu_custom_call.1} parent=5 // pred_check_branch
        %2153 = sbr.rel (%p2151) target = $region200
      $region199: #{tpu_custom_call.1} parent=5 // pred_region
        %s2154 = ssub.s32 %s45, 2
        // Predicated region
        $region201: #{tpu_custom_call.1} parent=199 // pred_check
          %p2155 = pneg %p692
        $region202: #{tpu_custom_call.1} parent=199 // pred_check_branch
          %2157 = sbr.rel (%p2155) target = $region204
        $region203: #{tpu_custom_call.1} parent=199 // pred_region
          %s2158 = sand.u32 %s677, 1
          %s2159 = scalar_lea.sflag [#allocation4], %s2158
          %s2160 = sand.u32 %s677, 1
          %s2161 = smul.addr %s2160, 8
          %s2162 = scalar_lea.vmem [#allocation26], %s2161
          %2164 = dma.done %s2159, 128
        $region204: #{tpu_custom_call.1} parent=199 // pred_fallthru
          _
      $region200: #{tpu_custom_call.1} parent=5 // pred_fallthru
        _
    $region6: #{tpu_custom_call.1} parent=1 // loop_footer
      %s49 = sadd.s32 1, %s45
    $region7: #{tpu_custom_call.1} parent=1 // loop_footer_branch
      %44 = sbr.rel target = $region3
    $region8: #{tpu_custom_call.1} parent=1 // loop_exit
      _
    %2165 = vsyncpa [#allocation3], 1
    %s2166 = scalar_lea.sflag [#allocation3], 1
    %2167 = vsyncpa %s2166, 1
    %2168 = vsyncpa [#allocation6], 1
    %2169 = vsyncpa [#allocation9], 1
    %2170 = vsyncpa [#allocation12], 1
    %2171 = vsyncpa [#allocation15], 1
    %2172 = vsyncpa [#allocation18], 1
    %2173 = vsyncpa [#allocation21], 1
    %2174 = vsyncpa [#allocation24], 1
    %2175 = vsyncpa [#allocation4], 1
    %s2176 = scalar_lea.sflag [#allocation4], 1
    %2177 = vsyncpa %s2176, 1

</llo_original>
